<compile_context>
chip_gen: v7x
topology: tpu7x:2x2x1
jax: 0.10.0
libtpu: 0.0.40
codegen_flags: <defaults>
</compile_context>

<pallas_src>
import functools
import math

import jax
import jax.numpy as jnp
from jax.experimental import pallas as pl
from jax.experimental.pallas import tpu as pltpu


# ---------------------------------------------------------------------------
# Kernels
# ---------------------------------------------------------------------------

def _layernorm_kernel(x_ref, g_ref, b_ref, o_ref, *, eps):
    x = x_ref[...].astype(jnp.float32)                       # (tm, D)
    d = x.shape[-1]
    mean = jnp.mean(x, axis=-1, keepdims=True)
    xc = x - mean
    # torch std(-1) is unbiased (divide by D-1); eps is added to std, not var.
    var = jnp.sum(xc * xc, axis=-1, keepdims=True) / jnp.float32(d - 1)
    std = jnp.sqrt(var)
    y = g_ref[...].astype(jnp.float32) * xc / (std + jnp.float32(eps)) \
        + b_ref[...].astype(jnp.float32)
    o_ref[...] = y.astype(o_ref.dtype)


def _linear_kernel(x_ref, w_ref, b_ref, o_ref):
    acc = jnp.dot(x_ref[...], w_ref[...], preferred_element_type=jnp.float32)
    o_ref[...] = (acc + b_ref[...].astype(jnp.float32)).astype(o_ref.dtype)


def _linear_residual_kernel(x_ref, w_ref, b_ref, r_ref, o_ref):
    acc = jnp.dot(x_ref[...], w_ref[...], preferred_element_type=jnp.float32)
    acc = acc + b_ref[...].astype(jnp.float32) + r_ref[...].astype(jnp.float32)
    o_ref[...] = acc.astype(o_ref.dtype)


def _attention_kernel(q_ref, k_ref, v_ref, m_ref, o_ref, *, scale):
    q = q_ref[...][0, 0].astype(jnp.float32)                 # (Sq, dk)
    k = k_ref[...][0, 0].astype(jnp.float32)                 # (Sk, dk)
    v = v_ref[...][0, 0].astype(jnp.float32)                 # (Sk, dk)
    mask = m_ref[...][0]                                     # (Sq, Sk) int32

    s = jnp.dot(q, k.T, preferred_element_type=jnp.float32) * jnp.float32(scale)
    s = jnp.where(mask != 0, s, jnp.float32(-1e9))           # masked_fill(mask==0, -1e9)
    s_max = jnp.max(s, axis=-1, keepdims=True)
    p = jnp.exp(s - s_max)
    p = p / jnp.sum(p, axis=-1, keepdims=True)
    o = jnp.dot(p, v, preferred_element_type=jnp.float32)    # (Sq, dk)
    o_ref[...] = o[None, None].astype(o_ref.dtype)


def _ffn_residual_kernel(x_ref, w1_ref, b1_ref, w2_ref, b2_ref, r_ref, o_ref):
    h = jnp.dot(x_ref[...], w1_ref[...], preferred_element_type=jnp.float32)
    h = jnp.maximum(h + b1_ref[...].astype(jnp.float32), 0.0)
    o = jnp.dot(h, w2_ref[...], preferred_element_type=jnp.float32)
    o = o + b2_ref[...].astype(jnp.float32) + r_ref[...].astype(jnp.float32)
    o_ref[...] = o.astype(o_ref.dtype)


# ---------------------------------------------------------------------------
# pallas_call wrappers
# ---------------------------------------------------------------------------

def _row_tile(t):
    return 8 if t % 8 == 0 else t


def layernorm(x2d, gamma, beta, eps=1e-6):
    t, d = x2d.shape
    tm = _row_tile(t)
    return pl.pallas_call(
        functools.partial(_layernorm_kernel, eps=eps),
        out_shape=jax.ShapeDtypeStruct((t, d), x2d.dtype),
        grid=(t // tm,),
        in_specs=[pl.BlockSpec((tm, d), lambda i: (i, 0)),
                  pl.BlockSpec((1, d), lambda i: (0, 0)),
                  pl.BlockSpec((1, d), lambda i: (0, 0))],
        out_specs=pl.BlockSpec((tm, d), lambda i: (i, 0)),
        compiler_params=pltpu.CompilerParams(dimension_semantics=("parallel",)),
    )(x2d, gamma.reshape(1, d), beta.reshape(1, d))


def linear(x2d, w, b):
    t, kdim = x2d.shape
    n = w.shape[1]
    tm = _row_tile(t)
    return pl.pallas_call(
        _linear_kernel,
        out_shape=jax.ShapeDtypeStruct((t, n), x2d.dtype),
        grid=(t // tm,),
        in_specs=[pl.BlockSpec((tm, kdim), lambda i: (i, 0)),
                  pl.BlockSpec((kdim, n), lambda i: (0, 0)),
                  pl.BlockSpec((1, n), lambda i: (0, 0))],
        out_specs=pl.BlockSpec((tm, n), lambda i: (i, 0)),
        compiler_params=pltpu.CompilerParams(dimension_semantics=("parallel",)),
    )(x2d, w, b.reshape(1, n))


def linear_residual(x2d, w, b, residual2d):
    t, kdim = x2d.shape
    n = w.shape[1]
    tm = _row_tile(t)
    return pl.pallas_call(
        _linear_residual_kernel,
        out_shape=jax.ShapeDtypeStruct((t, n), residual2d.dtype),
        grid=(t // tm,),
        in_specs=[pl.BlockSpec((tm, kdim), lambda i: (i, 0)),
                  pl.BlockSpec((kdim, n), lambda i: (0, 0)),
                  pl.BlockSpec((1, n), lambda i: (0, 0)),
                  pl.BlockSpec((tm, n), lambda i: (i, 0))],
        out_specs=pl.BlockSpec((tm, n), lambda i: (i, 0)),
        compiler_params=pltpu.CompilerParams(dimension_semantics=("parallel",)),
    )(x2d, w, b.reshape(1, n), residual2d)


def scaled_attention(q4, k4, v4, mask3, scale):
    b, h, sq, dk = q4.shape
    sk = k4.shape[2]
    return pl.pallas_call(
        functools.partial(_attention_kernel, scale=scale),
        out_shape=jax.ShapeDtypeStruct((b, h, sq, dk), q4.dtype),
        grid=(b, h),
        in_specs=[pl.BlockSpec((1, 1, sq, dk), lambda bi, hi: (bi, hi, 0, 0)),
                  pl.BlockSpec((1, 1, sk, dk), lambda bi, hi: (bi, hi, 0, 0)),
                  pl.BlockSpec((1, 1, sk, dk), lambda bi, hi: (bi, hi, 0, 0)),
                  pl.BlockSpec((1, sq, sk), lambda bi, hi: (bi, 0, 0))],
        out_specs=pl.BlockSpec((1, 1, sq, dk), lambda bi, hi: (bi, hi, 0, 0)),
        compiler_params=pltpu.CompilerParams(
            dimension_semantics=("parallel", "parallel")),
    )(q4, k4, v4, mask3)


def ffn_residual(x2d, w1, b1, w2, b2, residual2d):
    t, d = x2d.shape
    dff = w1.shape[1]
    tm = _row_tile(t)
    return pl.pallas_call(
        _ffn_residual_kernel,
        out_shape=jax.ShapeDtypeStruct((t, d), residual2d.dtype),
        grid=(t // tm,),
        in_specs=[pl.BlockSpec((tm, d), lambda i: (i, 0)),
                  pl.BlockSpec((d, dff), lambda i: (0, 0)),
                  pl.BlockSpec((1, dff), lambda i: (0, 0)),
                  pl.BlockSpec((dff, d), lambda i: (0, 0)),
                  pl.BlockSpec((1, d), lambda i: (0, 0)),
                  pl.BlockSpec((tm, d), lambda i: (i, 0))],
        out_specs=pl.BlockSpec((tm, d), lambda i: (i, 0)),
        compiler_params=pltpu.CompilerParams(dimension_semantics=("parallel",)),
    )(x2d, w1, b1.reshape(1, dff), w2, b2.reshape(1, d), residual2d)


# ---------------------------------------------------------------------------
# DecoderLayer forward
# ---------------------------------------------------------------------------

def _mha_block(q_in, k_in, v_in, mask3, b, sq, sk, h,
               wq, bq, wk, bk, wv, bv, wo, bo, residual2d):
    d = q_in.shape[1]
    dk = d // h
    q = linear(q_in, wq, bq).reshape(b, sq, h, dk).transpose(0, 2, 1, 3)
    k = linear(k_in, wk, bk).reshape(b, sk, h, dk).transpose(0, 2, 1, 3)
    v = linear(v_in, wv, bv).reshape(b, sk, h, dk).transpose(0, 2, 1, 3)
    ctx = scaled_attention(q, k, v, mask3, 1.0 / math.sqrt(dk))     # (b, h, sq, dk)
    ctx2d = ctx.transpose(0, 2, 1, 3).reshape(b * sq, d)
    return linear_residual(ctx2d, wo, bo, residual2d)               # residual fused


def decoder_layer_forward(x, memory, src_mask, tgt_mask, params, *, num_heads):
    b, st, d = x.shape
    ss = memory.shape[1]
    x2 = x.reshape(b * st, d)
    m2 = memory.reshape(b * ss, d)

    tgt_mask3 = jnp.broadcast_to(tgt_mask, (b, st, st)).astype(jnp.int32)
    src_mask3 = jnp.broadcast_to(src_mask, (b, st, ss)).astype(jnp.int32)

    # sublayer 0: masked self-attention + residual
    xn = layernorm(x2, params["ln0_g"], params["ln0_b"])
    x2 = _mha_block(xn, xn, xn, tgt_mask3, b, st, st, num_heads,
                    params["self_Wq"], params["self_bq"],
                    params["self_Wk"], params["self_bk"],
                    params["self_Wv"], params["self_bv"],
                    params["self_Wo"], params["self_bo"], x2)

    # sublayer 1: encoder-decoder (source) attention + residual
    xn = layernorm(x2, params["ln1_g"], params["ln1_b"])
    x2 = _mha_block(xn, m2, m2, src_mask3, b, st, ss, num_heads,
                    params["src_Wq"], params["src_bq"],
                    params["src_Wk"], params["src_bk"],
                    params["src_Wv"], params["src_bv"],
                    params["src_Wo"], params["src_bo"], x2)

    # sublayer 2: position-wise feed-forward + residual
    xn = layernorm(x2, params["ln2_g"], params["ln2_b"])
    x2 = ffn_residual(xn, params["ffn_W1"], params["ffn_b1"],
                      params["ffn_W2"], params["ffn_b2"], x2)
    return x2.reshape(b, st, d)


# ---------------------------------------------------------------------------
# Pure-JAX reference (mirrors the PyTorch module, dropout = identity)
# ---------------------------------------------------------------------------

def _reference_decoder_layer(x, memory, src_mask, tgt_mask, params, *, num_heads):
    def ln(y, g, bta, eps=1e-6):
        mean = y.mean(-1, keepdims=True)
        var = ((y - mean) ** 2).sum(-1, keepdims=True) / (y.shape[-1] - 1)
        return g * (y - mean) / (jnp.sqrt(var) + eps) + bta

    def mha(q, k, v, mask, wq, bq, wk, bk, wv, bv, wo, bo):
        b, sq, d = q.shape
        sk = k.shape[1]
        dk = d // num_heads
        qh = (q @ wq + bq).reshape(b, sq, num_heads, dk).transpose(0, 2, 1, 3)
        kh = (k @ wk + bk).reshape(b, sk, num_heads, dk).transpose(0, 2, 1, 3)
        vh = (v @ wv + bv).reshape(b, sk, num_heads, dk).transpose(0, 2, 1, 3)
        s = jnp.einsum("bhqd,bhkd->bhqk", qh, kh) / math.sqrt(dk)
        s = jnp.where(mask[:, None] != 0, s, -1e9)
        p = jax.nn.softmax(s, axis=-1)
        ctx = jnp.einsum("bhqk,bhkd->bhqd", p, vh)
        ctx = ctx.transpose(0, 2, 1, 3).reshape(b, sq, d)
        return ctx @ wo + bo

    b, st, d = x.shape
    ss = memory.shape[1]
    tgt_mask3 = jnp.broadcast_to(tgt_mask, (b, st, st))
    src_mask3 = jnp.broadcast_to(src_mask, (b, st, ss))

    xn = ln(x, params["ln0_g"], params["ln0_b"])
    x = x + mha(xn, xn, xn, tgt_mask3,
                params["self_Wq"], params["self_bq"],
                params["self_Wk"], params["self_bk"],
                params["self_Wv"], params["self_bv"],
                params["self_Wo"], params["self_bo"])
    xn = ln(x, params["ln1_g"], params["ln1_b"])
    x = x + mha(xn, memory, memory, src_mask3,
                params["src_Wq"], params["src_bq"],
                params["src_Wk"], params["src_bk"],
                params["src_Wv"], params["src_bv"],
                params["src_Wo"], params["src_bo"])
    xn = ln(x, params["ln2_g"], params["ln2_b"])
    ff = jnp.maximum(xn @ params["ffn_W1"] + params["ffn_b1"], 0.0) \
         @ params["ffn_W2"] + params["ffn_b2"]
    return x + ff


# ---------------------------------------------------------------------------
# Demo
# ---------------------------------------------------------------------------

if __name__ == "__main__":
    B, S_T, S_S, D_MODEL, N_HEADS, D_FF = 2, 8, 8, 32, 4, 64

    key = jax.random.PRNGKey(0)
    ks = jax.random.split(key, 32)
    it = iter(range(32))

    def _linp(k, din, dout):
        kw, kb = jax.random.split(k)
        w = jax.random.normal(kw, (din, dout), jnp.float32) / math.sqrt(din)
        bb = jax.random.normal(kb, (dout,), jnp.float32) * 0.02
        return w, bb

    params = {}
    for name in ("self", "src"):
        for proj in ("Wq", "Wk", "Wv", "Wo"):
            w, bb = _linp(ks[next(it)], D_MODEL, D_MODEL)
            params[f"{name}_{proj}"] = w
            params[f"{name}_b{proj[-1].lower()}"] = bb
    params["ffn_W1"], params["ffn_b1"] = _linp(ks[next(it)], D_MODEL, D_FF)
    params["ffn_W2"], params["ffn_b2"] = _linp(ks[next(it)], D_FF, D_MODEL)
    for i in range(3):
        params[f"ln{i}_g"] = 1.0 + 0.1 * jax.random.normal(
            ks[next(it)], (D_MODEL,), jnp.float32)
        params[f"ln{i}_b"] = 0.1 * jax.random.normal(
            ks[next(it)], (D_MODEL,), jnp.float32)

    x = jax.random.normal(ks[next(it)], (B, S_T, D_MODEL), jnp.float32)
    memory = jax.random.normal(ks[next(it)], (B, S_S, D_MODEL), jnp.float32)

    # causal target mask; source mask with 2 padded positions in batch element 1
    tgt_mask = jnp.tril(jnp.ones((S_T, S_T), jnp.int32))[None]      # (1, S_T, S_T)
    src_mask = jnp.ones((B, 1, S_S), jnp.int32).at[1, 0, S_S - 2:].set(0)

    fwd = jax.jit(functools.partial(decoder_layer_forward, num_heads=N_HEADS))
    out = jax.block_until_ready(fwd(x, memory, src_mask, tgt_mask, params))

    ref = _reference_decoder_layer(x, memory, src_mask, tgt_mask, params,
                                   num_heads=N_HEADS)
    assert out.shape == (B, S_T, D_MODEL)
    max_err = float(jnp.max(jnp.abs(out - ref)))
    assert jnp.allclose(out, ref, rtol=1e-3, atol=1e-3), max_err

    print("KERNEL_OK")
</pallas_src>

<mosaic_0001>
module attributes {stable_mosaic.version = 11 : i64} {
  func.func @_linear_kernel(%arg0: i32, %arg1: memref<8x32xf32, #tpu.memory_space<vmem>>, %arg2: memref<32x32xf32, #tpu.memory_space<vmem>>, %arg3: memref<1x32xf32, #tpu.memory_space<vmem>>, %arg4: memref<8x32xf32, #tpu.memory_space<vmem>>) attributes {dimension_semantics = [#tpu.dimension_semantics<parallel>], iteration_bounds = array<i64: 2>, scalar_prefetch = 0 : i64, scratch_operands = 0 : i64, tpu.core_type = #tpu.core_type<tc>, window_params = [{transform_indices = @transform_0, window_bounds = array<i64: 8, 32>}, {pipeline_mode = #tpu.pipeline_mode<synchronous>, transform_indices = @transform_1, window_bounds = array<i64: 32, 32>}, {pipeline_mode = #tpu.pipeline_mode<synchronous>, transform_indices = @transform_2, window_bounds = array<i64: 1, 32>}, {transform_indices = @transform_3, window_bounds = array<i64: 8, 32>}]} {
    %c0 = arith.constant 0 : index
    %c0_0 = arith.constant 0 : index
    %0 = vector.load %arg1[%c0, %c0_0] : memref<8x32xf32, #tpu.memory_space<vmem>>, vector<8x32xf32>
    %c0_1 = arith.constant 0 : index
    %c0_2 = arith.constant 0 : index
    %1 = vector.load %arg2[%c0_1, %c0_2] : memref<32x32xf32, #tpu.memory_space<vmem>>, vector<32x32xf32>
    %cst = arith.constant dense<0.000000e+00> : vector<8x32xf32>
    %2 = tpu.matmul %0, %1, %cst {dimension_numbers = #tpu.dot_dimension_numbers<[1], [0], [0], [1], [0, 0, 1, 1], [], []>} : vector<8x32xf32>, vector<32x32xf32>, vector<8x32xf32> -> vector<8x32xf32>
    %c0_3 = arith.constant 0 : index
    %c0_4 = arith.constant 0 : index
    %3 = vector.load %arg3[%c0_3, %c0_4] : memref<1x32xf32, #tpu.memory_space<vmem>>, vector<1x32xf32>
    %4 = vector.broadcast %3 : vector<1x32xf32> to vector<8x32xf32>
    %5 = arith.addf %2, %4 : vector<8x32xf32>
    %c0_5 = arith.constant 0 : index
    %c0_6 = arith.constant 0 : index
    %6 = vector.load %arg4[%c0_5, %c0_6] : memref<8x32xf32, #tpu.memory_space<vmem>>, vector<8x32xf32>
    tpu.vector_store %arg4[%c0_5, %c0_6], %5 {strides = array<i32>} : memref<8x32xf32, #tpu.memory_space<vmem>>, vector<8x32xf32>,
    return
  }
  func.func @transform_0(%arg0: i32) -> (i32, i32) {
    %c0_i32 = arith.constant 0 : i32
    %c0_i32_0 = arith.constant 0 : i32
    return %arg0, %c0_i32 : i32, i32
  }
  func.func @transform_1(%arg0: i32) -> (i32, i32) {
    %c0_i32 = arith.constant 0 : i32
    %c0_i32_0 = arith.constant 0 : i32
    %c0_i32_1 = arith.constant 0 : i32
    return %c0_i32, %c0_i32_0 : i32, i32
  }
  func.func @transform_2(%arg0: i32) -> (i32, i32) {
    %c0_i32 = arith.constant 0 : i32
    %c0_i32_0 = arith.constant 0 : i32
    %c0_i32_1 = arith.constant 0 : i32
    return %c0_i32, %c0_i32_0 : i32, i32
  }
  func.func @transform_3(%arg0: i32) -> (i32, i32) {
    %c0_i32 = arith.constant 0 : i32
    %c0_i32_0 = arith.constant 0 : i32
    return %arg0, %c0_i32 : i32, i32
  }
}

module attributes {stable_mosaic.version = 11 : i64} {
  func.func @_layernorm_kernel(%arg0: i32, %arg1: memref<8x32xf32, #tpu.memory_space<vmem>>, %arg2: memref<1x32xf32, #tpu.memory_space<vmem>>, %arg3: memref<1x32xf32, #tpu.memory_space<vmem>>, %arg4: memref<8x32xf32, #tpu.memory_space<vmem>>) attributes {dimension_semantics = [#tpu.dimension_semantics<parallel>], iteration_bounds = array<i64: 2>, scalar_prefetch = 0 : i64, scratch_operands = 0 : i64, tpu.core_type = #tpu.core_type<tc>, window_params = [{transform_indices = @transform_0, window_bounds = array<i64: 8, 32>}, {pipeline_mode = #tpu.pipeline_mode<synchronous>, transform_indices = @transform_1, window_bounds = array<i64: 1, 32>}, {pipeline_mode = #tpu.pipeline_mode<synchronous>, transform_indices = @transform_2, window_bounds = array<i64: 1, 32>}, {transform_indices = @transform_3, window_bounds = array<i64: 8, 32>}]} {
    %c0 = arith.constant 0 : index
    %c0_0 = arith.constant 0 : index
    %0 = vector.load %arg1[%c0, %c0_0] : memref<8x32xf32, #tpu.memory_space<vmem>>, vector<8x32xf32>
    %cst = arith.constant dense<0.000000e+00> : vector<8xf32>
    %1 = vector.multi_reduction <add>, %0, %cst [1] : vector<8x32xf32> to vector<8xf32>
    %2 = vector.shape_cast %1 : vector<8xf32> to vector<8x1xf32>
    %cst_1 = arith.constant 3.200000e+01 : f32
    %3 = vector.broadcast %cst_1 : f32 to vector<8x1xf32>
    %4 = arith.divf %2, %3 : vector<8x1xf32>
    %5 = vector.broadcast %4 : vector<8x1xf32> to vector<8x32xf32>
    %6 = arith.subf %0, %5 : vector<8x32xf32>
    %7 = arith.mulf %6, %6 : vector<8x32xf32>
    %cst_2 = arith.constant dense<0.000000e+00> : vector<8xf32>
    %8 = vector.multi_reduction <add>, %7, %cst_2 [1] : vector<8x32xf32> to vector<8xf32>
    %9 = vector.shape_cast %8 : vector<8xf32> to vector<8x1xf32>
    %cst_3 = arith.constant 3.100000e+01 : f32
    %10 = vector.broadcast %cst_3 : f32 to vector<8x1xf32>
    %11 = arith.divf %9, %10 : vector<8x1xf32>
    %12 = math.sqrt %11 : vector<8x1xf32>
    %c0_4 = arith.constant 0 : index
    %c0_5 = arith.constant 0 : index
    %13 = vector.load %arg2[%c0_4, %c0_5] : memref<1x32xf32, #tpu.memory_space<vmem>>, vector<1x32xf32>
    %14 = vector.broadcast %13 : vector<1x32xf32> to vector<8x32xf32>
    %15 = arith.mulf %14, %6 : vector<8x32xf32>
    %cst_6 = arith.constant 9.99999997E-7 : f32
    %16 = vector.broadcast %cst_6 : f32 to vector<8x1xf32>
    %17 = arith.addf %12, %16 : vector<8x1xf32>
    %18 = vector.broadcast %17 : vector<8x1xf32> to vector<8x32xf32>
    %19 = arith.divf %15, %18 : vector<8x32xf32>
    %c0_7 = arith.constant 0 : index
    %c0_8 = arith.constant 0 : index
    %20 = vector.load %arg3[%c0_7, %c0_8] : memref<1x32xf32, #tpu.memory_space<vmem>>, vector<1x32xf32>
    %21 = vector.broadcast %20 : vector<1x32xf32> to vector<8x32xf32>
    %22 = arith.addf %19, %21 : vector<8x32xf32>
    %c0_9 = arith.constant 0 : index
    %c0_10 = arith.constant 0 : index
    %23 = vector.load %arg4[%c0_9, %c0_10] : memref<8x32xf32, #tpu.memory_space<vmem>>, vector<8x32xf32>
    tpu.vector_store %arg4[%c0_9, %c0_10], %22 {strides = array<i32>} : memref<8x32xf32, #tpu.memory_space<vmem>>, vector<8x32xf32>,
    return
  }
  func.func @transform_0(%arg0: i32) -> (i32, i32) {
    %c0_i32 = arith.constant 0 : i32
    %c0_i32_0 = arith.constant 0 : i32
    return %arg0, %c0_i32 : i32, i32
  }
  func.func @transform_1(%arg0: i32) -> (i32, i32) {
    %c0_i32 = arith.constant 0 : i32
    %c0_i32_0 = arith.constant 0 : i32
    %c0_i32_1 = arith.constant 0 : i32
    return %c0_i32, %c0_i32_0 : i32, i32
  }
  func.func @transform_2(%arg0: i32) -> (i32, i32) {
    %c0_i32 = arith.constant 0 : i32
    %c0_i32_0 = arith.constant 0 : i32
    %c0_i32_1 = arith.constant 0 : i32
    return %c0_i32, %c0_i32_0 : i32, i32
  }
  func.func @transform_3(%arg0: i32) -> (i32, i32) {
    %c0_i32 = arith.constant 0 : i32
    %c0_i32_0 = arith.constant 0 : i32
    return %arg0, %c0_i32 : i32, i32
  }
}

module attributes {stable_mosaic.version = 11 : i64} {
  func.func @_attention_kernel(%arg0: i32, %arg1: i32, %arg2: memref<1x1x8x8xf32, #tpu.memory_space<vmem>>, %arg3: memref<1x1x8x8xf32, #tpu.memory_space<vmem>>, %arg4: memref<1x1x8x8xf32, #tpu.memory_space<vmem>>, %arg5: memref<1x8x8xi32, #tpu.memory_space<vmem>>, %arg6: memref<1x1x8x8xf32, #tpu.memory_space<vmem>>) attributes {dimension_semantics = [#tpu.dimension_semantics<parallel>, #tpu.dimension_semantics<parallel>], iteration_bounds = array<i64: 2, 4>, scalar_prefetch = 0 : i64, scratch_operands = 0 : i64, tpu.core_type = #tpu.core_type<tc>, window_params = [{transform_indices = @transform_0, window_bounds = array<i64: 1, 1, 8, 8>}, {transform_indices = @transform_1, window_bounds = array<i64: 1, 1, 8, 8>}, {transform_indices = @transform_2, window_bounds = array<i64: 1, 1, 8, 8>}, {transform_indices = @transform_3, window_bounds = array<i64: 1, 8, 8>}, {transform_indices = @transform_4, window_bounds = array<i64: 1, 1, 8, 8>}]} {
    %c0 = arith.constant 0 : index
    %c0_0 = arith.constant 0 : index
    %c0_1 = arith.constant 0 : index
    %c0_2 = arith.constant 0 : index
    %0 = vector.load %arg2[%c0, %c0_0, %c0_1, %c0_2] : memref<1x1x8x8xf32, #tpu.memory_space<vmem>>, vector<1x1x8x8xf32>
    %1 = vector.shape_cast %0 : vector<1x1x8x8xf32> to vector<8x8xf32>
    %c0_3 = arith.constant 0 : index
    %c0_4 = arith.constant 0 : index
    %c0_5 = arith.constant 0 : index
    %c0_6 = arith.constant 0 : index
    %2 = vector.load %arg3[%c0_3, %c0_4, %c0_5, %c0_6] : memref<1x1x8x8xf32, #tpu.memory_space<vmem>>, vector<1x1x8x8xf32>
    %3 = vector.shape_cast %2 : vector<1x1x8x8xf32> to vector<8x8xf32>
    %c0_7 = arith.constant 0 : index
    %c0_8 = arith.constant 0 : index
    %c0_9 = arith.constant 0 : index
    %c0_10 = arith.constant 0 : index
    %4 = vector.load %arg4[%c0_7, %c0_8, %c0_9, %c0_10] : memref<1x1x8x8xf32, #tpu.memory_space<vmem>>, vector<1x1x8x8xf32>
    %5 = vector.shape_cast %4 : vector<1x1x8x8xf32> to vector<8x8xf32>
    %c0_11 = arith.constant 0 : index
    %c0_12 = arith.constant 0 : index
    %c0_13 = arith.constant 0 : index
    %6 = vector.load %arg5[%c0_11, %c0_12, %c0_13] : memref<1x8x8xi32, #tpu.memory_space<vmem>>, vector<1x8x8xi32>
    %7 = vector.shape_cast %6 : vector<1x8x8xi32> to vector<8x8xi32>
    %8 = tpu.transpose %3, [1, 0] : vector<8x8xf32> -> vector<8x8xf32>
    %cst = arith.constant dense<0.000000e+00> : vector<8x8xf32>
    %9 = tpu.matmul %1, %8, %cst {dimension_numbers = #tpu.dot_dimension_numbers<[1], [0], [0], [1], [0, 0, 1, 1], [], []>} : vector<8x8xf32>, vector<8x8xf32>, vector<8x8xf32> -> vector<8x8xf32>
    %cst_14 = arith.constant 0.353553385 : f32
    %10 = vector.broadcast %cst_14 : f32 to vector<8x8xf32>
    %11 = arith.mulf %9, %10 : vector<8x8xf32>
    %c0_i32 = arith.constant 0 : i32
    %12 = vector.broadcast %c0_i32 : i32 to vector<8x8xi32>
    %13 = arith.cmpi ne, %7, %12 : vector<8x8xi32>
    %cst_15 = arith.constant -1.000000e+09 : f32
    %14 = vector.broadcast %cst_15 : f32 to vector<8x8xf32>
    %15 = arith.select %13, %11, %14 : vector<8x8xi1>, vector<8x8xf32>
    %cst_16 = arith.constant dense<0xFF800000> : vector<8xf32>
    %16 = vector.multi_reduction <maximumf>, %15, %cst_16 [1] : vector<8x8xf32> to vector<8xf32>
    %17 = vector.shape_cast %16 : vector<8xf32> to vector<8x1xf32>
    %18 = vector.broadcast %17 : vector<8x1xf32> to vector<8x8xf32>
    %19 = arith.subf %15, %18 : vector<8x8xf32>
    %20 = math.exp %19 : vector<8x8xf32>
    %cst_17 = arith.constant dense<0.000000e+00> : vector<8xf32>
    %21 = vector.multi_reduction <add>, %20, %cst_17 [1] : vector<8x8xf32> to vector<8xf32>
    %22 = vector.shape_cast %21 : vector<8xf32> to vector<8x1xf32>
    %23 = vector.broadcast %22 : vector<8x1xf32> to vector<8x8xf32>
    %24 = arith.divf %20, %23 : vector<8x8xf32>
    %cst_18 = arith.constant dense<0.000000e+00> : vector<8x8xf32>
    %25 = tpu.matmul %24, %5, %cst_18 {dimension_numbers = #tpu.dot_dimension_numbers<[1], [0], [0], [1], [0, 0, 1, 1], [], []>} : vector<8x8xf32>, vector<8x8xf32>, vector<8x8xf32> -> vector<8x8xf32>
    %26 = vector.shape_cast %25 : vector<8x8xf32> to vector<1x1x8x8xf32>
    %c0_19 = arith.constant 0 : index
    %c0_20 = arith.constant 0 : index
    %c0_21 = arith.constant 0 : index
    %c0_22 = arith.constant 0 : index
    %27 = vector.load %arg6[%c0_19, %c0_20, %c0_21, %c0_22] : memref<1x1x8x8xf32, #tpu.memory_space<vmem>>, vector<1x1x8x8xf32>
    tpu.vector_store %arg6[%c0_19, %c0_20, %c0_21, %c0_22], %26 {strides = array<i32>} : memref<1x1x8x8xf32, #tpu.memory_space<vmem>>, vector<1x1x8x8xf32>,
    return
  }
  func.func @transform_0(%arg0: i32, %arg1: i32) -> (i32, i32, i32, i32) {
    %c0_i32 = arith.constant 0 : i32
    %c0_i32_0 = arith.constant 0 : i32
    %c0_i32_1 = arith.constant 0 : i32
    return %arg0, %arg1, %c0_i32, %c0_i32_0 : i32, i32, i32, i32
  }
  func.func @transform_1(%arg0: i32, %arg1: i32) -> (i32, i32, i32, i32) {
    %c0_i32 = arith.constant 0 : i32
    %c0_i32_0 = arith.constant 0 : i32
    %c0_i32_1 = arith.constant 0 : i32
    return %arg0, %arg1, %c0_i32, %c0_i32_0 : i32, i32, i32, i32
  }
  func.func @transform_2(%arg0: i32, %arg1: i32) -> (i32, i32, i32, i32) {
    %c0_i32 = arith.constant 0 : i32
    %c0_i32_0 = arith.constant 0 : i32
    %c0_i32_1 = arith.constant 0 : i32
    return %arg0, %arg1, %c0_i32, %c0_i32_0 : i32, i32, i32, i32
  }
  func.func @transform_3(%arg0: i32, %arg1: i32) -> (i32, i32, i32) {
    %c0_i32 = arith.constant 0 : i32
    %c0_i32_0 = arith.constant 0 : i32
    %c0_i32_1 = arith.constant 0 : i32
    return %arg0, %c0_i32, %c0_i32_0 : i32, i32, i32
  }
  func.func @transform_4(%arg0: i32, %arg1: i32) -> (i32, i32, i32, i32) {
    %c0_i32 = arith.constant 0 : i32
    %c0_i32_0 = arith.constant 0 : i32
    %c0_i32_1 = arith.constant 0 : i32
    return %arg0, %arg1, %c0_i32, %c0_i32_0 : i32, i32, i32, i32
  }
}

module attributes {stable_mosaic.version = 11 : i64} {
  func.func @_linear_residual_kernel(%arg0: i32, %arg1: memref<8x32xf32, #tpu.memory_space<vmem>>, %arg2: memref<32x32xf32, #tpu.memory_space<vmem>>, %arg3: memref<1x32xf32, #tpu.memory_space<vmem>>, %arg4: memref<8x32xf32, #tpu.memory_space<vmem>>, %arg5: memref<8x32xf32, #tpu.memory_space<vmem>>) attributes {dimension_semantics = [#tpu.dimension_semantics<parallel>], iteration_bounds = array<i64: 2>, scalar_prefetch = 0 : i64, scratch_operands = 0 : i64, tpu.core_type = #tpu.core_type<tc>, window_params = [{transform_indices = @transform_0, window_bounds = array<i64: 8, 32>}, {pipeline_mode = #tpu.pipeline_mode<synchronous>, transform_indices = @transform_1, window_bounds = array<i64: 32, 32>}, {pipeline_mode = #tpu.pipeline_mode<synchronous>, transform_indices = @transform_2, window_bounds = array<i64: 1, 32>}, {transform_indices = @transform_3, window_bounds = array<i64: 8, 32>}, {transform_indices = @transform_4, window_bounds = array<i64: 8, 32>}]} {
    %c0 = arith.constant 0 : index
    %c0_0 = arith.constant 0 : index
    %0 = vector.load %arg1[%c0, %c0_0] : memref<8x32xf32, #tpu.memory_space<vmem>>, vector<8x32xf32>
    %c0_1 = arith.constant 0 : index
    %c0_2 = arith.constant 0 : index
    %1 = vector.load %arg2[%c0_1, %c0_2] : memref<32x32xf32, #tpu.memory_space<vmem>>, vector<32x32xf32>
    %cst = arith.constant dense<0.000000e+00> : vector<8x32xf32>
    %2 = tpu.matmul %0, %1, %cst {dimension_numbers = #tpu.dot_dimension_numbers<[1], [0], [0], [1], [0, 0, 1, 1], [], []>} : vector<8x32xf32>, vector<32x32xf32>, vector<8x32xf32> -> vector<8x32xf32>
    %c0_3 = arith.constant 0 : index
    %c0_4 = arith.constant 0 : index
    %3 = vector.load %arg3[%c0_3, %c0_4] : memref<1x32xf32, #tpu.memory_space<vmem>>, vector<1x32xf32>
    %4 = vector.broadcast %3 : vector<1x32xf32> to vector<8x32xf32>
    %5 = arith.addf %2, %4 : vector<8x32xf32>
    %c0_5 = arith.constant 0 : index
    %c0_6 = arith.constant 0 : index
    %6 = vector.load %arg4[%c0_5, %c0_6] : memref<8x32xf32, #tpu.memory_space<vmem>>, vector<8x32xf32>
    %7 = arith.addf %5, %6 : vector<8x32xf32>
    %c0_7 = arith.constant 0 : index
    %c0_8 = arith.constant 0 : index
    %8 = vector.load %arg5[%c0_7, %c0_8] : memref<8x32xf32, #tpu.memory_space<vmem>>, vector<8x32xf32>
    tpu.vector_store %arg5[%c0_7, %c0_8], %7 {strides = array<i32>} : memref<8x32xf32, #tpu.memory_space<vmem>>, vector<8x32xf32>,
    return
  }
  func.func @transform_0(%arg0: i32) -> (i32, i32) {
    %c0_i32 = arith.constant 0 : i32
    %c0_i32_0 = arith.constant 0 : i32
    return %arg0, %c0_i32 : i32, i32
  }
  func.func @transform_1(%arg0: i32) -> (i32, i32) {
    %c0_i32 = arith.constant 0 : i32
    %c0_i32_0 = arith.constant 0 : i32
    %c0_i32_1 = arith.constant 0 : i32
    return %c0_i32, %c0_i32_0 : i32, i32
  }
  func.func @transform_2(%arg0: i32) -> (i32, i32) {
    %c0_i32 = arith.constant 0 : i32
    %c0_i32_0 = arith.constant 0 : i32
    %c0_i32_1 = arith.constant 0 : i32
    return %c0_i32, %c0_i32_0 : i32, i32
  }
  func.func @transform_3(%arg0: i32) -> (i32, i32) {
    %c0_i32 = arith.constant 0 : i32
    %c0_i32_0 = arith.constant 0 : i32
    return %arg0, %c0_i32 : i32, i32
  }
  func.func @transform_4(%arg0: i32) -> (i32, i32) {
    %c0_i32 = arith.constant 0 : i32
    %c0_i32_0 = arith.constant 0 : i32
    return %arg0, %c0_i32 : i32, i32
  }
}

module attributes {stable_mosaic.version = 11 : i64} {
  func.func @_ffn_residual_kernel(%arg0: i32, %arg1: memref<8x32xf32, #tpu.memory_space<vmem>>, %arg2: memref<32x64xf32, #tpu.memory_space<vmem>>, %arg3: memref<1x64xf32, #tpu.memory_space<vmem>>, %arg4: memref<64x32xf32, #tpu.memory_space<vmem>>, %arg5: memref<1x32xf32, #tpu.memory_space<vmem>>, %arg6: memref<8x32xf32, #tpu.memory_space<vmem>>, %arg7: memref<8x32xf32, #tpu.memory_space<vmem>>) attributes {dimension_semantics = [#tpu.dimension_semantics<parallel>], iteration_bounds = array<i64: 2>, scalar_prefetch = 0 : i64, scratch_operands = 0 : i64, tpu.core_type = #tpu.core_type<tc>, window_params = [{transform_indices = @transform_0, window_bounds = array<i64: 8, 32>}, {pipeline_mode = #tpu.pipeline_mode<synchronous>, transform_indices = @transform_1, window_bounds = array<i64: 32, 64>}, {pipeline_mode = #tpu.pipeline_mode<synchronous>, transform_indices = @transform_2, window_bounds = array<i64: 1, 64>}, {pipeline_mode = #tpu.pipeline_mode<synchronous>, transform_indices = @transform_3, window_bounds = array<i64: 64, 32>}, {pipeline_mode = #tpu.pipeline_mode<synchronous>, transform_indices = @transform_4, window_bounds = array<i64: 1, 32>}, {transform_indices = @transform_5, window_bounds = array<i64: 8, 32>}, {transform_indices = @transform_6, window_bounds = array<i64: 8, 32>}]} {
    %c0 = arith.constant 0 : index
    %c0_0 = arith.constant 0 : index
    %0 = vector.load %arg1[%c0, %c0_0] : memref<8x32xf32, #tpu.memory_space<vmem>>, vector<8x32xf32>
    %c0_1 = arith.constant 0 : index
    %c0_2 = arith.constant 0 : index
    %1 = vector.load %arg2[%c0_1, %c0_2] : memref<32x64xf32, #tpu.memory_space<vmem>>, vector<32x64xf32>
    %cst = arith.constant dense<0.000000e+00> : vector<8x64xf32>
    %2 = tpu.matmul %0, %1, %cst {dimension_numbers = #tpu.dot_dimension_numbers<[1], [0], [0], [1], [0, 0, 1, 1], [], []>} : vector<8x32xf32>, vector<32x64xf32>, vector<8x64xf32> -> vector<8x64xf32>
    %c0_3 = arith.constant 0 : index
    %c0_4 = arith.constant 0 : index
    %3 = vector.load %arg3[%c0_3, %c0_4] : memref<1x64xf32, #tpu.memory_space<vmem>>, vector<1x64xf32>
    %4 = vector.broadcast %3 : vector<1x64xf32> to vector<8x64xf32>
    %5 = arith.addf %2, %4 : vector<8x64xf32>
    %cst_5 = arith.constant 0.000000e+00 : f32
    %6 = vector.broadcast %cst_5 : f32 to vector<8x64xf32>
    %7 = arith.maximumf %5, %6 : vector<8x64xf32>
    %c0_6 = arith.constant 0 : index
    %c0_7 = arith.constant 0 : index
    %8 = vector.load %arg4[%c0_6, %c0_7] : memref<64x32xf32, #tpu.memory_space<vmem>>, vector<64x32xf32>
    %cst_8 = arith.constant dense<0.000000e+00> : vector<8x32xf32>
    %9 = tpu.matmul %7, %8, %cst_8 {dimension_numbers = #tpu.dot_dimension_numbers<[1], [0], [0], [1], [0, 0, 1, 1], [], []>} : vector<8x64xf32>, vector<64x32xf32>, vector<8x32xf32> -> vector<8x32xf32>
    %c0_9 = arith.constant 0 : index
    %c0_10 = arith.constant 0 : index
    %10 = vector.load %arg5[%c0_9, %c0_10] : memref<1x32xf32, #tpu.memory_space<vmem>>, vector<1x32xf32>
    %11 = vector.broadcast %10 : vector<1x32xf32> to vector<8x32xf32>
    %12 = arith.addf %9, %11 : vector<8x32xf32>
    %c0_11 = arith.constant 0 : index
    %c0_12 = arith.constant 0 : index
    %13 = vector.load %arg6[%c0_11, %c0_12] : memref<8x32xf32, #tpu.memory_space<vmem>>, vector<8x32xf32>
    %14 = arith.addf %12, %13 : vector<8x32xf32>
    %c0_13 = arith.constant 0 : index
    %c0_14 = arith.constant 0 : index
    %15 = vector.load %arg7[%c0_13, %c0_14] : memref<8x32xf32, #tpu.memory_space<vmem>>, vector<8x32xf32>
    tpu.vector_store %arg7[%c0_13, %c0_14], %14 {strides = array<i32>} : memref<8x32xf32, #tpu.memory_space<vmem>>, vector<8x32xf32>,
    return
  }
  func.func @transform_0(%arg0: i32) -> (i32, i32) {
    %c0_i32 = arith.constant 0 : i32
    %c0_i32_0 = arith.constant 0 : i32
    return %arg0, %c0_i32 : i32, i32
  }
  func.func @transform_1(%arg0: i32) -> (i32, i32) {
    %c0_i32 = arith.constant 0 : i32
    %c0_i32_0 = arith.constant 0 : i32
    %c0_i32_1 = arith.constant 0 : i32
    return %c0_i32, %c0_i32_0 : i32, i32
  }
  func.func @transform_2(%arg0: i32) -> (i32, i32) {
    %c0_i32 = arith.constant 0 : i32
    %c0_i32_0 = arith.constant 0 : i32
    %c0_i32_1 = arith.constant 0 : i32
    return %c0_i32, %c0_i32_0 : i32, i32
  }
  func.func @transform_3(%arg0: i32) -> (i32, i32) {
    %c0_i32 = arith.constant 0 : i32
    %c0_i32_0 = arith.constant 0 : i32
    %c0_i32_1 = arith.constant 0 : i32
    return %c0_i32, %c0_i32_0 : i32, i32
  }
  func.func @transform_4(%arg0: i32) -> (i32, i32) {
    %c0_i32 = arith.constant 0 : i32
    %c0_i32_0 = arith.constant 0 : i32
    %c0_i32_1 = arith.constant 0 : i32
    return %c0_i32, %c0_i32_0 : i32, i32
  }
  func.func @transform_5(%arg0: i32) -> (i32, i32) {
    %c0_i32 = arith.constant 0 : i32
    %c0_i32_0 = arith.constant 0 : i32
    return %arg0, %c0_i32 : i32, i32
  }
  func.func @transform_6(%arg0: i32) -> (i32, i32) {
    %c0_i32 = arith.constant 0 : i32
    %c0_i32_0 = arith.constant 0 : i32
    return %arg0, %c0_i32 : i32, i32
  }
}

</mosaic_0001>

<llo_original>
// kernel: decoder_layer_forward.14
$region0: #{decoder_layer_forward.14}
  #allocation0 [shape = 'u32[]', space=smem, size = 0x4, offset = 0x4, fixed_abs, tag = 'smem constant byte address 0x4 - core index']
  #allocation1 [shape = 'u32[144,128]{1,0:T(1,128)}', space=vmem, size = 0x12000, scoped, tag = 'internal scratch']
  %s0 = inlined_call_operand.vmem [shape: f32[16,32], index: 0, kind: input, shape index: {}]
  %s1 = inlined_call_operand.vmem [shape: f32[1,32], index: 1, kind: input, shape index: {}]
  %s2 = inlined_call_operand.vmem [shape: f32[1,32], index: 2, kind: input, shape index: {}]
  %s3 = inlined_call_operand.vmem [shape: f32[16,32], index: 3, kind: output, shape index: {}]
  %s4 = sld [smem:[#allocation0]]
  $region45: #{decoder_layer_forward.14} parent=0
    _
  %s6 = ssub.s32 1, %s4
  %s7 = scalar_select 0, %s6, %s4
  loop: start=0, step=1, limit=4
  $region2: #{decoder_layer_forward.14} parent=0 // loop_pre_header
    _
  $region3: #{decoder_layer_forward.14} parent=0 // loop_header
    %s9 = sphi 0, %s13
    %p10 = scmp.ge.s32.totalorder %s9, 4
    %s19 = sphi 0, %s21
    %s22 = sphi 0, %s19
    %s23 = sphi 0, %s22
    %s39 = sphi 0, %s23
    %s43 = sphi 0, %s43
    %s45 = sphi 0, %s43
    %s46 = sphi 0, %s45
    %s60 = sphi 0, %s46
    %s64 = sphi 0, %s64
    %s66 = sphi 0, %s64
    %s67 = sphi 0, %s66
    %s81 = sphi 0, %s67
    %s87 = sphi 0, %s89
    %s90 = sphi 0, %s87
    %s91 = sphi 0, %s90
    %s107 = sphi 0, %s91
  $region4: #{decoder_layer_forward.14} parent=0 // loop_header_branch
    %12 = sbr.rel (%p10) target = $region8
  $region5: #{decoder_layer_forward.14} parent=0 // loop_body
    %s14 = ssub.s32 %s9, 1
    %s15 = ssub.s32 %s9, 2
    %s16 = sadd.s32 %s9, 1
    %s17 = ssub.s32 %s9, %s16
    %p18 = scmp.eq.s32.totalorder %s17, 0
    %s20 = sadd.s32 %s19, 1
    %s21 = scalar_select %p18, %s19, %s20
    %p24 = pneg %p18
    %p25 = scmp.eq.s32.totalorder %s9, 1
    %p26 = por %p24, %p25
    %p27 = scmp.ne.s32.totalorder %s19, %s22
    %p28 = scmp.eq.s32.totalorder %s9, 0
    %p29 = por %p27, %p28
    %p30 = scmp.ne.s32.totalorder %s19, %s22
    %p31 = scmp.eq.s32.totalorder %s14, 1
    %p32 = por %p30, %p31
    %p33 = scmp.ne.s32.totalorder %s22, %s23
    %p34 = scmp.eq.s32.totalorder %s14, 0
    %p35 = por %p33, %p34
    %p36 = scmp.ne.s32.totalorder %s22, %s23
    %p37 = scmp.eq.s32.totalorder %s15, 1
    %p38 = por %p36, %p37
    %p40 = scmp.ne.s32.totalorder %s23, %s39
    %p41 = scmp.eq.s32.totalorder %s15, 0
    %p42 = por %p40, %p41
    %s44 = sadd.s32 %s43, 1
    %p47 = scmp.eq.s32.totalorder %s9, 1
    %p48 = scmp.ne.s32.totalorder %s43, %s45
    %p49 = scmp.eq.s32.totalorder %s9, 0
    %p50 = por %p48, %p49
    %p51 = scmp.ne.s32.totalorder %s43, %s45
    %p52 = scmp.eq.s32.totalorder %s14, 1
    %p53 = por %p51, %p52
    %p54 = scmp.ne.s32.totalorder %s45, %s46
    %p55 = scmp.eq.s32.totalorder %s14, 0
    %p56 = por %p54, %p55
    %p57 = scmp.ne.s32.totalorder %s45, %s46
    %p58 = scmp.eq.s32.totalorder %s15, 1
    %p59 = por %p57, %p58
    %p61 = scmp.ne.s32.totalorder %s46, %s60
    %p62 = scmp.eq.s32.totalorder %s15, 0
    %p63 = por %p61, %p62
    %s65 = sadd.s32 %s64, 1
    %p68 = scmp.eq.s32.totalorder %s9, 1
    %p69 = scmp.ne.s32.totalorder %s64, %s66
    %p70 = scmp.eq.s32.totalorder %s9, 0
    %p71 = por %p69, %p70
    %p72 = scmp.ne.s32.totalorder %s64, %s66
    %p73 = scmp.eq.s32.totalorder %s14, 1
    %p74 = por %p72, %p73
    %p75 = scmp.ne.s32.totalorder %s66, %s67
    %p76 = scmp.eq.s32.totalorder %s14, 0
    %p77 = por %p75, %p76
    %p78 = scmp.ne.s32.totalorder %s66, %s67
    %p79 = scmp.eq.s32.totalorder %s15, 1
    %p80 = por %p78, %p79
    %p82 = scmp.ne.s32.totalorder %s67, %s81
    %p83 = scmp.eq.s32.totalorder %s15, 0
    %p84 = por %p82, %p83
    %s85 = ssub.s32 %s9, %s16
    %p86 = scmp.eq.s32.totalorder %s85, 0
    %s88 = sadd.s32 %s87, 1
    %s89 = scalar_select %p86, %s87, %s88
    %p92 = pneg %p86
    %p93 = scmp.eq.s32.totalorder %s9, 1
    %p94 = por %p92, %p93
    %p95 = scmp.ne.s32.totalorder %s87, %s90
    %p96 = scmp.eq.s32.totalorder %s9, 0
    %p97 = por %p95, %p96
    %p98 = scmp.ne.s32.totalorder %s87, %s90
    %p99 = scmp.eq.s32.totalorder %s14, 1
    %p100 = por %p98, %p99
    %p101 = scmp.ne.s32.totalorder %s90, %s91
    %p102 = scmp.eq.s32.totalorder %s14, 0
    %p103 = por %p101, %p102
    %p104 = scmp.ne.s32.totalorder %s90, %s91
    %p105 = scmp.eq.s32.totalorder %s15, 1
    %p106 = por %p104, %p105
    %p108 = scmp.ne.s32.totalorder %s91, %s107
    %p109 = scmp.eq.s32.totalorder %s15, 0
    %p110 = por %p108, %p109
    %p111 = scmp.le.s32.totalorder 1, %s9
    %p112 = scmp.lt.s32.totalorder %s9, 3
    %p113 = pnand %p111, %p112
    %p114 = pneg %p113
    // Predicated region
    $region9: #{decoder_layer_forward.14} parent=5 // pred_check
      _
    $region10: #{decoder_layer_forward.14} parent=5 // pred_check_branch
      %116 = sbr.rel (%p113) target = $region12
    $region11: #{decoder_layer_forward.14} parent=5 // pred_region
      %s117 = ssub.s32 %s9, 1
      // Predicated region
      $region13: #{decoder_layer_forward.14} parent=11 // pred_check
        %p118 = pneg %p56
      $region14: #{decoder_layer_forward.14} parent=11 // pred_check_branch
        %120 = sbr.rel (%p118) target = $region16
      $region15: #{decoder_layer_forward.14} parent=11 // pred_region
        _
      $region16: #{decoder_layer_forward.14} parent=11 // pred_fallthru
        _
      // Predicated region
      $region17: #{decoder_layer_forward.14} parent=11 // pred_check
        %p121 = pneg %p77
      $region18: #{decoder_layer_forward.14} parent=11 // pred_check_branch
        %123 = sbr.rel (%p121) target = $region20
      $region19: #{decoder_layer_forward.14} parent=11 // pred_region
        _
      $region20: #{decoder_layer_forward.14} parent=11 // pred_fallthru
        _
    $region12: #{decoder_layer_forward.14} parent=5 // pred_fallthru
      _
    %p124 = scmp.lt.s32.totalorder %s9, 2
    // Predicated region
    $region21: #{decoder_layer_forward.14} parent=5 // pred_check
      %p125 = pneg %p124
    $region22: #{decoder_layer_forward.14} parent=5 // pred_check_branch
      %127 = sbr.rel (%p125) target = $region24
    $region23: #{decoder_layer_forward.14} parent=5 // pred_region
      // Predicated region
      $region25: #{decoder_layer_forward.14} parent=23 // pred_check
        %p128 = pneg %p29
      $region26: #{decoder_layer_forward.14} parent=23 // pred_check_branch
        %130 = sbr.rel (%p128) target = $region28
      $region27: #{decoder_layer_forward.14} parent=23 // pred_region
        %p131 = scmp.lt.s32.totalorder %s9, 1
        %s132 = scalar_select %p131, %s9, 1
        %s133 = smul.addr %s132, 8
        %s134 = scalar_lea.vmem %s0, %s133
      $region28: #{decoder_layer_forward.14} parent=23 // pred_fallthru
        _
    $region24: #{decoder_layer_forward.14} parent=5 // pred_fallthru
      _
    %p135 = scmp.le.s32.totalorder 1, %s9
    %p136 = scmp.lt.s32.totalorder %s9, 3
    %p137 = pnand %p135, %p136
    %p138 = pneg %p137
    // Predicated region
    $region29: #{decoder_layer_forward.14} parent=5 // pred_check
      _
    $region30: #{decoder_layer_forward.14} parent=5 // pred_check_branch
      %140 = sbr.rel (%p137) target = $region32
    $region31: #{decoder_layer_forward.14} parent=5 // pred_region
      %s141 = ssub.s32 %s9, 1
      %p142 = scmp.lt.s32.totalorder %s14, 1
      %s143 = scalar_select %p142, %s14, 1
      %s144 = smul.addr %s143, 8
      %s145 = scalar_lea.vmem %s0, %s144
      %p146 = pneg %p35
      %p147 = pneg %p32
      %p148 = pneg %p56
      %p149 = pneg %p53
      %p150 = pneg %p77
      %p151 = pneg %p74
      %p152 = pneg %p103
      %p153 = pneg %p100
      %p154 = scmp.lt.s32.totalorder %s14, 1
      %s155 = scalar_select %p154, %s14, 1
      %s156 = smul.addr %s155, 8
      %s157 = scalar_lea.vmem %s3, %s156
      %p158 = scmp.lt.s32.totalorder %s14, 1
      %s159 = scalar_select %p158, %s14, 1
      %s160 = smul.addr %s159, 8
      %s161 = scalar_lea.vmem %s0, %s160
      %p162 = scmp.lt.s32.totalorder %s14, 1
      %s163 = scalar_select %p162, %s14, 1
      %s164 = smul.addr %s163, 8
      %s165 = scalar_lea.vmem %s3, %s164
      %v166 = vld [vmem:[%s161] sm:$0xff]
      %vm167 = vcmask 261120
      %v168 = vsel %vm167, %v166, 0.0
      %169 = vadd.xlane.f32.xlu0 %v168
      %v170 = vpop.xlane.xlu0 %169
      %v171 = vrcp.pop 32.0
      %v172 = vmul.f32 %v170, %v171
      %v173 = vsub.f32 %v166, %v172
      %v174 = vmul.f32 %v173, %v173
      %v175 = vsel %vm167, %v174, 0.0
      %176 = vadd.xlane.f32.xlu0 %v175
      %v177 = vpop.xlane.xlu0 %176
      %v178 = vrcp.pop 31.0
      %v179 = vmul.f32 %v177, %v178
      %v180 = vrsqrt.pop %v179
      %v181 = vmul.f32 %v179, %v180
      %vm182 = vcmp.eq.f32.partialorder %v179, inf
      %v183 = vsel %vm182, %v179, %v181
      %vm184 = vcmp.eq.f32.partialorder %v179, 0.0
      %v185 = vand.u32 %v179, 2147483648
      %v186 = vsel %vm184, %v185, %v183
      %v187 = vld [vmem:[%s1] sm:$0x1]
      %v189 = vlaneseq
      %v190 = vshrl.u32 %v189, 7
      %v191 = vsub.s32 0, %v190
      %v192 = vrot.slane %v187, %v191
      %v194 = vmul.f32 %v192, %v173
      %v195 = vadd.f32 %v186, 1e-06
      %v196 = vrcp.pop %v195
      %v197 = vmul.f32 %v194, %v196
      %v198 = vld [vmem:[%s2] sm:$0x1]
      %v200 = vlaneseq
      %v201 = vshrl.u32 %v200, 7
      %v202 = vsub.s32 0, %v201
      %v203 = vrot.slane %v198, %v202
      %v205 = vadd.f32 %v197, %v203
      %206 = vst.msk [vmem:[%s165] sm:$0xff] %vm167, %v205
      %p207 = scmp.lt.s32.totalorder %s14, 1
      %s208 = scalar_select %p207, %s14, 1
      %s209 = smul.addr %s208, 8
      %s210 = scalar_lea.vmem %s3, %s209
      // Predicated region
      $region33: #{decoder_layer_forward.14} parent=31 // pred_check
        %p211 = pneg %p100
      $region34: #{decoder_layer_forward.14} parent=31 // pred_check_branch
        %213 = sbr.rel (%p211) target = $region36
      $region35: #{decoder_layer_forward.14} parent=31 // pred_region
        _
      $region36: #{decoder_layer_forward.14} parent=31 // pred_fallthru
        _
    $region32: #{decoder_layer_forward.14} parent=5 // pred_fallthru
      _
    %p214 = scmp.le.s32.totalorder 2, %s9
    // Predicated region
    $region37: #{decoder_layer_forward.14} parent=5 // pred_check
      %p215 = pneg %p214
    $region38: #{decoder_layer_forward.14} parent=5 // pred_check_branch
      %217 = sbr.rel (%p215) target = $region40
    $region39: #{decoder_layer_forward.14} parent=5 // pred_region
      %s218 = ssub.s32 %s9, 2
      // Predicated region
      $region41: #{decoder_layer_forward.14} parent=39 // pred_check
        %p219 = pneg %p106
      $region42: #{decoder_layer_forward.14} parent=39 // pred_check_branch
        %221 = sbr.rel (%p219) target = $region44
      $region43: #{decoder_layer_forward.14} parent=39 // pred_region
        %p222 = scmp.lt.s32.totalorder %s15, 1
        %s223 = scalar_select %p222, %s15, 1
        %s224 = smul.addr %s223, 8
        %s225 = scalar_lea.vmem %s3, %s224
      $region44: #{decoder_layer_forward.14} parent=39 // pred_fallthru
        _
    $region40: #{decoder_layer_forward.14} parent=5 // pred_fallthru
      _
  $region6: #{decoder_layer_forward.14} parent=0 // loop_footer
    %s13 = sadd.s32 1, %s9
  $region7: #{decoder_layer_forward.14} parent=0 // loop_footer_branch
    %8 = sbr.rel target = $region3
  $region8: #{decoder_layer_forward.14} parent=0 // loop_exit
    _

// kernel: decoder_layer_forward.16
$region0: #{decoder_layer_forward.16}
  #allocation0 [shape = 'u32[]', space=smem, size = 0x4, offset = 0x4, fixed_abs, tag = 'smem constant byte address 0x4 - core index']
  #allocation1 [shape = 'u32[144,128]{1,0:T(1,128)}', space=vmem, size = 0x12000, scoped, tag = 'internal scratch']
  %s0 = inlined_call_operand.vmem [shape: f32[16,32], index: 0, kind: input, shape index: {}]
  %s1 = inlined_call_operand.vmem [shape: f32[32,32], index: 1, kind: input, shape index: {}]
  %s2 = inlined_call_operand.vmem [shape: f32[1,32], index: 2, kind: input, shape index: {}]
  %s3 = inlined_call_operand.vmem [shape: f32[16,32], index: 3, kind: output, shape index: {}]
  %s4 = sld [smem:[#allocation0]]
  $region45: #{decoder_layer_forward.16} parent=0
    _
  %s6 = ssub.s32 1, %s4
  %s7 = scalar_select 0, %s6, %s4
  loop: start=0, step=1, limit=4
  $region2: #{decoder_layer_forward.16} parent=0 // loop_pre_header
    _
  $region3: #{decoder_layer_forward.16} parent=0 // loop_header
    %s9 = sphi 0, %s13
    %p10 = scmp.ge.s32.totalorder %s9, 4
    %s19 = sphi 0, %s21
    %s22 = sphi 0, %s19
    %s23 = sphi 0, %s22
    %s39 = sphi 0, %s23
    %s43 = sphi 0, %s43
    %s45 = sphi 0, %s43
    %s46 = sphi 0, %s45
    %s60 = sphi 0, %s46
    %s64 = sphi 0, %s64
    %s66 = sphi 0, %s64
    %s67 = sphi 0, %s66
    %s81 = sphi 0, %s67
    %s87 = sphi 0, %s89
    %s90 = sphi 0, %s87
    %s91 = sphi 0, %s90
    %s107 = sphi 0, %s91
  $region4: #{decoder_layer_forward.16} parent=0 // loop_header_branch
    %12 = sbr.rel (%p10) target = $region8
  $region5: #{decoder_layer_forward.16} parent=0 // loop_body
    %s14 = ssub.s32 %s9, 1
    %s15 = ssub.s32 %s9, 2
    %s16 = sadd.s32 %s9, 1
    %s17 = ssub.s32 %s9, %s16
    %p18 = scmp.eq.s32.totalorder %s17, 0
    %s20 = sadd.s32 %s19, 1
    %s21 = scalar_select %p18, %s19, %s20
    %p24 = pneg %p18
    %p25 = scmp.eq.s32.totalorder %s9, 1
    %p26 = por %p24, %p25
    %p27 = scmp.ne.s32.totalorder %s19, %s22
    %p28 = scmp.eq.s32.totalorder %s9, 0
    %p29 = por %p27, %p28
    %p30 = scmp.ne.s32.totalorder %s19, %s22
    %p31 = scmp.eq.s32.totalorder %s14, 1
    %p32 = por %p30, %p31
    %p33 = scmp.ne.s32.totalorder %s22, %s23
    %p34 = scmp.eq.s32.totalorder %s14, 0
    %p35 = por %p33, %p34
    %p36 = scmp.ne.s32.totalorder %s22, %s23
    %p37 = scmp.eq.s32.totalorder %s15, 1
    %p38 = por %p36, %p37
    %p40 = scmp.ne.s32.totalorder %s23, %s39
    %p41 = scmp.eq.s32.totalorder %s15, 0
    %p42 = por %p40, %p41
    %s44 = sadd.s32 %s43, 1
    %p47 = scmp.eq.s32.totalorder %s9, 1
    %p48 = scmp.ne.s32.totalorder %s43, %s45
    %p49 = scmp.eq.s32.totalorder %s9, 0
    %p50 = por %p48, %p49
    %p51 = scmp.ne.s32.totalorder %s43, %s45
    %p52 = scmp.eq.s32.totalorder %s14, 1
    %p53 = por %p51, %p52
    %p54 = scmp.ne.s32.totalorder %s45, %s46
    %p55 = scmp.eq.s32.totalorder %s14, 0
    %p56 = por %p54, %p55
    %p57 = scmp.ne.s32.totalorder %s45, %s46
    %p58 = scmp.eq.s32.totalorder %s15, 1
    %p59 = por %p57, %p58
    %p61 = scmp.ne.s32.totalorder %s46, %s60
    %p62 = scmp.eq.s32.totalorder %s15, 0
    %p63 = por %p61, %p62
    %s65 = sadd.s32 %s64, 1
    %p68 = scmp.eq.s32.totalorder %s9, 1
    %p69 = scmp.ne.s32.totalorder %s64, %s66
    %p70 = scmp.eq.s32.totalorder %s9, 0
    %p71 = por %p69, %p70
    %p72 = scmp.ne.s32.totalorder %s64, %s66
    %p73 = scmp.eq.s32.totalorder %s14, 1
    %p74 = por %p72, %p73
    %p75 = scmp.ne.s32.totalorder %s66, %s67
    %p76 = scmp.eq.s32.totalorder %s14, 0
    %p77 = por %p75, %p76
    %p78 = scmp.ne.s32.totalorder %s66, %s67
    %p79 = scmp.eq.s32.totalorder %s15, 1
    %p80 = por %p78, %p79
    %p82 = scmp.ne.s32.totalorder %s67, %s81
    %p83 = scmp.eq.s32.totalorder %s15, 0
    %p84 = por %p82, %p83
    %s85 = ssub.s32 %s9, %s16
    %p86 = scmp.eq.s32.totalorder %s85, 0
    %s88 = sadd.s32 %s87, 1
    %s89 = scalar_select %p86, %s87, %s88
    %p92 = pneg %p86
    %p93 = scmp.eq.s32.totalorder %s9, 1
    %p94 = por %p92, %p93
    %p95 = scmp.ne.s32.totalorder %s87, %s90
    %p96 = scmp.eq.s32.totalorder %s9, 0
    %p97 = por %p95, %p96
    %p98 = scmp.ne.s32.totalorder %s87, %s90
    %p99 = scmp.eq.s32.totalorder %s14, 1
    %p100 = por %p98, %p99
    %p101 = scmp.ne.s32.totalorder %s90, %s91
    %p102 = scmp.eq.s32.totalorder %s14, 0
    %p103 = por %p101, %p102
    %p104 = scmp.ne.s32.totalorder %s90, %s91
    %p105 = scmp.eq.s32.totalorder %s15, 1
    %p106 = por %p104, %p105
    %p108 = scmp.ne.s32.totalorder %s91, %s107
    %p109 = scmp.eq.s32.totalorder %s15, 0
    %p110 = por %p108, %p109
    %p111 = scmp.le.s32.totalorder 1, %s9
    %p112 = scmp.lt.s32.totalorder %s9, 3
    %p113 = pnand %p111, %p112
    %p114 = pneg %p113
    // Predicated region
    $region9: #{decoder_layer_forward.16} parent=5 // pred_check
      _
    $region10: #{decoder_layer_forward.16} parent=5 // pred_check_branch
      %116 = sbr.rel (%p113) target = $region12
    $region11: #{decoder_layer_forward.16} parent=5 // pred_region
      %s117 = ssub.s32 %s9, 1
      // Predicated region
      $region13: #{decoder_layer_forward.16} parent=11 // pred_check
        %p118 = pneg %p56
      $region14: #{decoder_layer_forward.16} parent=11 // pred_check_branch
        %120 = sbr.rel (%p118) target = $region16
      $region15: #{decoder_layer_forward.16} parent=11 // pred_region
        _
      $region16: #{decoder_layer_forward.16} parent=11 // pred_fallthru
        _
      // Predicated region
      $region17: #{decoder_layer_forward.16} parent=11 // pred_check
        %p121 = pneg %p77
      $region18: #{decoder_layer_forward.16} parent=11 // pred_check_branch
        %123 = sbr.rel (%p121) target = $region20
      $region19: #{decoder_layer_forward.16} parent=11 // pred_region
        _
      $region20: #{decoder_layer_forward.16} parent=11 // pred_fallthru
        _
    $region12: #{decoder_layer_forward.16} parent=5 // pred_fallthru
      _
    %p124 = scmp.lt.s32.totalorder %s9, 2
    // Predicated region
    $region21: #{decoder_layer_forward.16} parent=5 // pred_check
      %p125 = pneg %p124
    $region22: #{decoder_layer_forward.16} parent=5 // pred_check_branch
      %127 = sbr.rel (%p125) target = $region24
    $region23: #{decoder_layer_forward.16} parent=5 // pred_region
      // Predicated region
      $region25: #{decoder_layer_forward.16} parent=23 // pred_check
        %p128 = pneg %p29
      $region26: #{decoder_layer_forward.16} parent=23 // pred_check_branch
        %130 = sbr.rel (%p128) target = $region28
      $region27: #{decoder_layer_forward.16} parent=23 // pred_region
        %p131 = scmp.lt.s32.totalorder %s9, 1
        %s132 = scalar_select %p131, %s9, 1
        %s133 = smul.addr %s132, 8
        %s134 = scalar_lea.vmem %s0, %s133
      $region28: #{decoder_layer_forward.16} parent=23 // pred_fallthru
        _
    $region24: #{decoder_layer_forward.16} parent=5 // pred_fallthru
      _
    %p135 = scmp.le.s32.totalorder 1, %s9
    %p136 = scmp.lt.s32.totalorder %s9, 3
    %p137 = pnand %p135, %p136
    %p138 = pneg %p137
    // Predicated region
    $region29: #{decoder_layer_forward.16} parent=5 // pred_check
      _
    $region30: #{decoder_layer_forward.16} parent=5 // pred_check_branch
      %140 = sbr.rel (%p137) target = $region32
    $region31: #{decoder_layer_forward.16} parent=5 // pred_region
      %s141 = ssub.s32 %s9, 1
      %p142 = scmp.lt.s32.totalorder %s14, 1
      %s143 = scalar_select %p142, %s14, 1
      %s144 = smul.addr %s143, 8
      %s145 = scalar_lea.vmem %s0, %s144
      %p146 = pneg %p35
      %p147 = pneg %p32
      %p148 = pneg %p56
      %p149 = pneg %p53
      %p150 = pneg %p77
      %p151 = pneg %p74
      %p152 = pneg %p103
      %p153 = pneg %p100
      %p154 = scmp.lt.s32.totalorder %s14, 1
      %s155 = scalar_select %p154, %s14, 1
      %s156 = smul.addr %s155, 8
      %s157 = scalar_lea.vmem %s3, %s156
      %p158 = scmp.lt.s32.totalorder %s14, 1
      %s159 = scalar_select %p158, %s14, 1
      %s160 = smul.addr %s159, 8
      %s161 = scalar_lea.vmem %s0, %s160
      %p162 = scmp.lt.s32.totalorder %s14, 1
      %s163 = scalar_select %p162, %s14, 1
      %s164 = smul.addr %s163, 8
      %s165 = scalar_lea.vmem %s3, %s164
      %v166 = vld [vmem:[%s161] sm:$0xff]
      %v167 = vld [vmem:[%s1] sm:$0xff]
      %v168 = vld [vmem:[%s1 + $0x8] sm:$0xff]
      %v169 = vld [vmem:[%s1 + $0x10] sm:$0xff]
      %v170 = vld [vmem:[%s1 + $0x18] sm:$0xff]
      %v171 = vld [vmem:[%s2] sm:$0x1]
      %v173 = vlaneseq
      %v174 = vshrl.u32 %v173, 7
      %v175 = vsub.s32 0, %v174
      %v176 = vrot.slane %v171, %v175
      %vm178 = vcmask 261120
      %v180 = vsel %vm178, %v166, 0
      %182 = vmatprep.subr.mxu0 0.0
      %183 = vmatpush1.msra.mxu0 %v167
      %184 = vmatprep.subr.mxu0 0.0
      %185 = vmatpush1.msra.mxu0 %v168
      %186 = vmatprep.subr.mxu0 0.0
      %187 = vmatpush1.msra.mxu0 %v169
      %188 = vmatprep.subr.mxu0 0.0
      %189 = vmatpush1.msra.mxu0 %v170
      %190 = vmatprep.subr.mxu0 0.0
      %191 = vmatpush1.msra.mxu0 0.0
      %192 = vmatprep.subr.mxu0 0.0
      %193 = vmatpush1.msra.mxu0 0.0
      %194 = vmatprep.subr.mxu0 0.0
      %195 = vmatpush1.msra.mxu0 0.0
      %196 = vmatprep.subr.mxu0 0.0
      %197 = vmatpush1.msra.mxu0 0.0
      %198 = vmatprep.subr.mxu0 0.0
      %199 = vmatpush1.msra.mxu0 0.0
      %200 = vmatprep.subr.mxu0 0.0
      %201 = vmatpush1.msra.mxu0 0.0
      %202 = vmatprep.subr.mxu0 0.0
      %203 = vmatpush1.msra.mxu0 0.0
      %204 = vmatprep.subr.mxu0 0.0
      %205 = vmatpush1.msra.mxu0 0.0
      %206 = vmatprep.subr.mxu0 0.0
      %207 = vmatpush1.msra.mxu0 0.0
      %208 = vmatprep.subr.mxu0 0.0
      %209 = vmatpush1.msra.mxu0 0.0
      %210 = vmatprep.subr.mxu0 0.0
      %211 = vmatpush1.msra.mxu0 0.0
      %212 = vmatprep.subr.mxu0 0.0
      %213 = vmatpush1.msra.mxu0 0.0
      %214 = vmatprep.subr.mxu0 0.0
      %215 = vmatpush1.msra.mxu0 0.0
      %216 = vmatprep.subr.mxu0 0.0
      %217 = vmatpush1.msra.mxu0 0.0
      %218 = vmatprep.subr.mxu0 0.0
      %219 = vmatpush1.msra.mxu0 0.0
      %220 = vmatprep.subr.mxu0 0.0
      %221 = vmatpush1.msra.mxu0 0.0
      %222 = vmatprep.subr.mxu0 0.0
      %223 = vmatpush1.msra.mxu0 0.0
      %224 = vmatprep.subr.mxu0 0.0
      %225 = vmatpush1.msra.mxu0 0.0
      %226 = vmatprep.subr.mxu0 0.0
      %227 = vmatpush1.msra.mxu0 0.0
      %228 = vmatprep.subr.mxu0 0.0
      %229 = vmatpush1.msra.mxu0 0.0
      %230 = vmatprep.subr.mxu0 0.0
      %231 = vmatpush1.msra.mxu0 0.0
      %232 = vmatprep.subr.mxu0 0.0
      %233 = vmatpush1.msra.mxu0 0.0
      %234 = vmatprep.subr.mxu0 0.0
      %235 = vmatpush1.msra.mxu0 0.0
      %236 = vmatprep.subr.mxu0 0.0
      %237 = vmatpush1.msra.mxu0 0.0
      %238 = vmatprep.subr.mxu0 0.0
      %239 = vmatpush1.msra.mxu0 0.0
      %240 = vmatprep.subr.mxu0 0.0
      %241 = vmatpush1.msra.mxu0 0.0
      %242 = vmatprep.subr.mxu0 0.0
      %243 = vmatpush1.msra.mxu0 0.0
      %244 = vmatprep.subr.mxu0 0.0
      %245 = vmatpush1.msra.mxu0 0.0
      %246 = vmatprep.mubr.f32.mxu0 0.0
      %247 = vmatmul.mubr.f32.gmra.mrb[0].mxu0 %v180
      %v248 = vpop.f32.mrb[0].mxu0
      %v249 = vadd.f32 %v176, %v248
      %v250 = vpop.f32.mrb[0].mxu0
      %251 = vdwg.mxu0
      %252 = vst.msk [vmem:[%s165] sm:$0xff] %vm178, %v249
      %p253 = scmp.lt.s32.totalorder %s14, 1
      %s254 = scalar_select %p253, %s14, 1
      %s255 = smul.addr %s254, 8
      %s256 = scalar_lea.vmem %s3, %s255
      // Predicated region
      $region33: #{decoder_layer_forward.16} parent=31 // pred_check
        %p257 = pneg %p100
      $region34: #{decoder_layer_forward.16} parent=31 // pred_check_branch
        %259 = sbr.rel (%p257) target = $region36
      $region35: #{decoder_layer_forward.16} parent=31 // pred_region
        _
      $region36: #{decoder_layer_forward.16} parent=31 // pred_fallthru
        _
    $region32: #{decoder_layer_forward.16} parent=5 // pred_fallthru
      _
    %p260 = scmp.le.s32.totalorder 2, %s9
    // Predicated region
    $region37: #{decoder_layer_forward.16} parent=5 // pred_check
      %p261 = pneg %p260
    $region38: #{decoder_layer_forward.16} parent=5 // pred_check_branch
      %263 = sbr.rel (%p261) target = $region40
    $region39: #{decoder_layer_forward.16} parent=5 // pred_region
      %s264 = ssub.s32 %s9, 2
      // Predicated region
      $region41: #{decoder_layer_forward.16} parent=39 // pred_check
        %p265 = pneg %p106
      $region42: #{decoder_layer_forward.16} parent=39 // pred_check_branch
        %267 = sbr.rel (%p265) target = $region44
      $region43: #{decoder_layer_forward.16} parent=39 // pred_region
        %p268 = scmp.lt.s32.totalorder %s15, 1
        %s269 = scalar_select %p268, %s15, 1
        %s270 = smul.addr %s269, 8
        %s271 = scalar_lea.vmem %s3, %s270
      $region44: #{decoder_layer_forward.16} parent=39 // pred_fallthru
        _
    $region40: #{decoder_layer_forward.16} parent=5 // pred_fallthru
      _
  $region6: #{decoder_layer_forward.16} parent=0 // loop_footer
    %s13 = sadd.s32 1, %s9
  $region7: #{decoder_layer_forward.16} parent=0 // loop_footer_branch
    %8 = sbr.rel target = $region3
  $region8: #{decoder_layer_forward.16} parent=0 // loop_exit
    _

// kernel: decoder_layer_forward.18
$region0: #{decoder_layer_forward.18}
  #allocation0 [shape = 'u32[]', space=smem, size = 0x4, offset = 0x4, fixed_abs, tag = 'smem constant byte address 0x4 - core index']
  #allocation1 [shape = 'u32[144,128]{1,0:T(1,128)}', space=vmem, size = 0x12000, scoped, tag = 'internal scratch']
  %s0 = inlined_call_operand.vmem [shape: f32[2,4,8,8], index: 0, kind: input, shape index: {}]
  %s1 = inlined_call_operand.vmem [shape: f32[2,4,8,8], index: 1, kind: input, shape index: {}]
  %s2 = inlined_call_operand.vmem [shape: f32[2,4,8,8], index: 2, kind: input, shape index: {}]
  %s3 = inlined_call_operand.vmem [shape: s32[2,8,8], index: 3, kind: input, shape index: {}]
  %s4 = inlined_call_operand.vmem [shape: f32[2,4,8,8], index: 4, kind: output, shape index: {}]
  %s5 = sld [smem:[#allocation0]]
  $region49: #{decoder_layer_forward.18} parent=0
    _
  %s7 = ssub.s32 1, %s5
  %s8 = scalar_select 0, %s7, %s5
  loop: start=0, step=1, limit=10
  $region2: #{decoder_layer_forward.18} parent=0 // loop_pre_header
    _
  $region3: #{decoder_layer_forward.18} parent=0 // loop_header
    %s10 = sphi 0, %s14
    %p11 = scmp.ge.s32.totalorder %s10, 10
    %s17 = sphi 0, %s29
    %s18 = sphi 0, %s25
    %s19 = sphi 0, %s17
    %s20 = sphi 0, %s18
    %s21 = sphi 0, %s19
    %s22 = sphi 0, %s20
    %s34 = sphi 0, %s36
    %s37 = sphi 0, %s34
    %s38 = sphi 0, %s37
    %s54 = sphi 0, %s38
    %s62 = sphi 0, %s64
    %s65 = sphi 0, %s62
    %s66 = sphi 0, %s65
    %s82 = sphi 0, %s66
    %s90 = sphi 0, %s92
    %s93 = sphi 0, %s90
    %s94 = sphi 0, %s93
    %s110 = sphi 0, %s94
    %s116 = sphi 0, %s118
    %s119 = sphi 0, %s116
    %s120 = sphi 0, %s119
    %s136 = sphi 0, %s120
    %s144 = sphi 0, %s146
    %s147 = sphi 0, %s144
    %s148 = sphi 0, %s147
    %s164 = sphi 0, %s148
  $region4: #{decoder_layer_forward.18} parent=0 // loop_header_branch
    %13 = sbr.rel (%p11) target = $region8
  $region5: #{decoder_layer_forward.18} parent=0 // loop_body
    %s15 = ssub.s32 %s10, 1
    %s16 = ssub.s32 %s10, 2
    %s23 = sadd.s32 1, %s18
    %p24 = scmp.ge.s32.totalorder %s23, 4
    %s25 = scalar_select %p24, 0, %s23
    %s26 = sadd.s32 1, %s17
    %s27 = scalar_select %p24, %s26, %s17
    %p28 = scmp.ge.s32.totalorder %s27, 2
    %s29 = scalar_select %p28, 0, %s27
    %s30 = ssub.s32 %s17, %s29
    %s31 = ssub.s32 %s18, %s25
    %s32 = sor.u32 %s30, %s31
    %p33 = scmp.eq.s32.totalorder %s32, 0
    %s35 = sadd.s32 %s34, 1
    %s36 = scalar_select %p33, %s34, %s35
    %p39 = pneg %p33
    %p40 = scmp.eq.s32.totalorder %s10, 7
    %p41 = por %p39, %p40
    %p42 = scmp.ne.s32.totalorder %s34, %s37
    %p43 = scmp.eq.s32.totalorder %s10, 0
    %p44 = por %p42, %p43
    %p45 = scmp.ne.s32.totalorder %s34, %s37
    %p46 = scmp.eq.s32.totalorder %s15, 7
    %p47 = por %p45, %p46
    %p48 = scmp.ne.s32.totalorder %s37, %s38
    %p49 = scmp.eq.s32.totalorder %s15, 0
    %p50 = por %p48, %p49
    %p51 = scmp.ne.s32.totalorder %s37, %s38
    %p52 = scmp.eq.s32.totalorder %s16, 7
    %p53 = por %p51, %p52
    %p55 = scmp.ne.s32.totalorder %s38, %s54
    %p56 = scmp.eq.s32.totalorder %s16, 0
    %p57 = por %p55, %p56
    %s58 = ssub.s32 %s17, %s29
    %s59 = ssub.s32 %s18, %s25
    %s60 = sor.u32 %s58, %s59
    %p61 = scmp.eq.s32.totalorder %s60, 0
    %s63 = sadd.s32 %s62, 1
    %s64 = scalar_select %p61, %s62, %s63
    %p67 = pneg %p61
    %p68 = scmp.eq.s32.totalorder %s10, 7
    %p69 = por %p67, %p68
    %p70 = scmp.ne.s32.totalorder %s62, %s65
    %p71 = scmp.eq.s32.totalorder %s10, 0
    %p72 = por %p70, %p71
    %p73 = scmp.ne.s32.totalorder %s62, %s65
    %p74 = scmp.eq.s32.totalorder %s15, 7
    %p75 = por %p73, %p74
    %p76 = scmp.ne.s32.totalorder %s65, %s66
    %p77 = scmp.eq.s32.totalorder %s15, 0
    %p78 = por %p76, %p77
    %p79 = scmp.ne.s32.totalorder %s65, %s66
    %p80 = scmp.eq.s32.totalorder %s16, 7
    %p81 = por %p79, %p80
    %p83 = scmp.ne.s32.totalorder %s66, %s82
    %p84 = scmp.eq.s32.totalorder %s16, 0
    %p85 = por %p83, %p84
    %s86 = ssub.s32 %s17, %s29
    %s87 = ssub.s32 %s18, %s25
    %s88 = sor.u32 %s86, %s87
    %p89 = scmp.eq.s32.totalorder %s88, 0
    %s91 = sadd.s32 %s90, 1
    %s92 = scalar_select %p89, %s90, %s91
    %p95 = pneg %p89
    %p96 = scmp.eq.s32.totalorder %s10, 7
    %p97 = por %p95, %p96
    %p98 = scmp.ne.s32.totalorder %s90, %s93
    %p99 = scmp.eq.s32.totalorder %s10, 0
    %p100 = por %p98, %p99
    %p101 = scmp.ne.s32.totalorder %s90, %s93
    %p102 = scmp.eq.s32.totalorder %s15, 7
    %p103 = por %p101, %p102
    %p104 = scmp.ne.s32.totalorder %s93, %s94
    %p105 = scmp.eq.s32.totalorder %s15, 0
    %p106 = por %p104, %p105
    %p107 = scmp.ne.s32.totalorder %s93, %s94
    %p108 = scmp.eq.s32.totalorder %s16, 7
    %p109 = por %p107, %p108
    %p111 = scmp.ne.s32.totalorder %s94, %s110
    %p112 = scmp.eq.s32.totalorder %s16, 0
    %p113 = por %p111, %p112
    %s114 = ssub.s32 %s17, %s29
    %p115 = scmp.eq.s32.totalorder %s114, 0
    %s117 = sadd.s32 %s116, 1
    %s118 = scalar_select %p115, %s116, %s117
    %p121 = pneg %p115
    %p122 = scmp.eq.s32.totalorder %s10, 7
    %p123 = por %p121, %p122
    %p124 = scmp.ne.s32.totalorder %s116, %s119
    %p125 = scmp.eq.s32.totalorder %s10, 0
    %p126 = por %p124, %p125
    %p127 = scmp.ne.s32.totalorder %s116, %s119
    %p128 = scmp.eq.s32.totalorder %s15, 7
    %p129 = por %p127, %p128
    %p130 = scmp.ne.s32.totalorder %s119, %s120
    %p131 = scmp.eq.s32.totalorder %s15, 0
    %p132 = por %p130, %p131
    %p133 = scmp.ne.s32.totalorder %s119, %s120
    %p134 = scmp.eq.s32.totalorder %s16, 7
    %p135 = por %p133, %p134
    %p137 = scmp.ne.s32.totalorder %s120, %s136
    %p138 = scmp.eq.s32.totalorder %s16, 0
    %p139 = por %p137, %p138
    %s140 = ssub.s32 %s17, %s29
    %s141 = ssub.s32 %s18, %s25
    %s142 = sor.u32 %s140, %s141
    %p143 = scmp.eq.s32.totalorder %s142, 0
    %s145 = sadd.s32 %s144, 1
    %s146 = scalar_select %p143, %s144, %s145
    %p149 = pneg %p143
    %p150 = scmp.eq.s32.totalorder %s10, 7
    %p151 = por %p149, %p150
    %p152 = scmp.ne.s32.totalorder %s144, %s147
    %p153 = scmp.eq.s32.totalorder %s10, 0
    %p154 = por %p152, %p153
    %p155 = scmp.ne.s32.totalorder %s144, %s147
    %p156 = scmp.eq.s32.totalorder %s15, 7
    %p157 = por %p155, %p156
    %p158 = scmp.ne.s32.totalorder %s147, %s148
    %p159 = scmp.eq.s32.totalorder %s15, 0
    %p160 = por %p158, %p159
    %p161 = scmp.ne.s32.totalorder %s147, %s148
    %p162 = scmp.eq.s32.totalorder %s16, 7
    %p163 = por %p161, %p162
    %p165 = scmp.ne.s32.totalorder %s148, %s164
    %p166 = scmp.eq.s32.totalorder %s16, 0
    %p167 = por %p165, %p166
    %p168 = scmp.le.s32.totalorder 1, %s10
    %p169 = scmp.lt.s32.totalorder %s10, 9
    %p170 = pnand %p168, %p169
    %p171 = pneg %p170
    // Predicated region
    $region9: #{decoder_layer_forward.18} parent=5 // pred_check
      _
    $region10: #{decoder_layer_forward.18} parent=5 // pred_check_branch
      %173 = sbr.rel (%p170) target = $region12
    $region11: #{decoder_layer_forward.18} parent=5 // pred_region
      %s174 = ssub.s32 %s10, 1
    $region12: #{decoder_layer_forward.18} parent=5 // pred_fallthru
      _
    %p175 = scmp.lt.s32.totalorder %s10, 8
    // Predicated region
    $region13: #{decoder_layer_forward.18} parent=5 // pred_check
      %p176 = pneg %p175
    $region14: #{decoder_layer_forward.18} parent=5 // pred_check_branch
      %178 = sbr.rel (%p176) target = $region16
    $region15: #{decoder_layer_forward.18} parent=5 // pred_region
      // Predicated region
      $region17: #{decoder_layer_forward.18} parent=15 // pred_check
        %p179 = pneg %p44
      $region18: #{decoder_layer_forward.18} parent=15 // pred_check_branch
        %181 = sbr.rel (%p179) target = $region20
      $region19: #{decoder_layer_forward.18} parent=15 // pred_region
        %p182 = scmp.lt.s32.totalorder %s17, 1
        %s183 = scalar_select %p182, %s17, 1
        %p184 = scmp.lt.s32.totalorder %s18, 3
        %s185 = scalar_select %p184, %s18, 3
        %s186 = smul.addr %s183, 4
        %s187 = sadd.s32 %s185, %s186
        %s188 = smul.addr %s187, 8
        %s189 = scalar_lea.vmem %s0, %s188
      $region20: #{decoder_layer_forward.18} parent=15 // pred_fallthru
        _
      // Predicated region
      $region21: #{decoder_layer_forward.18} parent=15 // pred_check
        %p190 = pneg %p72
      $region22: #{decoder_layer_forward.18} parent=15 // pred_check_branch
        %192 = sbr.rel (%p190) target = $region24
      $region23: #{decoder_layer_forward.18} parent=15 // pred_region
        %p193 = scmp.lt.s32.totalorder %s17, 1
        %s194 = scalar_select %p193, %s17, 1
        %p195 = scmp.lt.s32.totalorder %s18, 3
        %s196 = scalar_select %p195, %s18, 3
        %s197 = smul.addr %s194, 4
        %s198 = sadd.s32 %s196, %s197
        %s199 = smul.addr %s198, 8
        %s200 = scalar_lea.vmem %s1, %s199
      $region24: #{decoder_layer_forward.18} parent=15 // pred_fallthru
        _
      // Predicated region
      $region25: #{decoder_layer_forward.18} parent=15 // pred_check
        %p201 = pneg %p100
      $region26: #{decoder_layer_forward.18} parent=15 // pred_check_branch
        %203 = sbr.rel (%p201) target = $region28
      $region27: #{decoder_layer_forward.18} parent=15 // pred_region
        %p204 = scmp.lt.s32.totalorder %s17, 1
        %s205 = scalar_select %p204, %s17, 1
        %p206 = scmp.lt.s32.totalorder %s18, 3
        %s207 = scalar_select %p206, %s18, 3
        %s208 = smul.addr %s205, 4
        %s209 = sadd.s32 %s207, %s208
        %s210 = smul.addr %s209, 8
        %s211 = scalar_lea.vmem %s2, %s210
      $region28: #{decoder_layer_forward.18} parent=15 // pred_fallthru
        _
      // Predicated region
      $region29: #{decoder_layer_forward.18} parent=15 // pred_check
        %p212 = pneg %p126
      $region30: #{decoder_layer_forward.18} parent=15 // pred_check_branch
        %214 = sbr.rel (%p212) target = $region32
      $region31: #{decoder_layer_forward.18} parent=15 // pred_region
        %p215 = scmp.lt.s32.totalorder %s17, 1
        %s216 = scalar_select %p215, %s17, 1
        %s217 = smul.addr %s216, 8
        %s218 = scalar_lea.vmem %s3, %s217
      $region32: #{decoder_layer_forward.18} parent=15 // pred_fallthru
        _
    $region16: #{decoder_layer_forward.18} parent=5 // pred_fallthru
      _
    %p219 = scmp.le.s32.totalorder 1, %s10
    %p220 = scmp.lt.s32.totalorder %s10, 9
    %p221 = pnand %p219, %p220
    %p222 = pneg %p221
    // Predicated region
    $region33: #{decoder_layer_forward.18} parent=5 // pred_check
      _
    $region34: #{decoder_layer_forward.18} parent=5 // pred_check_branch
      %224 = sbr.rel (%p221) target = $region36
    $region35: #{decoder_layer_forward.18} parent=5 // pred_region
      %s225 = ssub.s32 %s10, 1
      %p226 = scmp.lt.s32.totalorder %s19, 1
      %s227 = scalar_select %p226, %s19, 1
      %p228 = scmp.lt.s32.totalorder %s20, 3
      %s229 = scalar_select %p228, %s20, 3
      %s230 = smul.addr %s227, 4
      %s231 = sadd.s32 %s229, %s230
      %s232 = smul.addr %s231, 8
      %s233 = scalar_lea.vmem %s0, %s232
      %p234 = pneg %p50
      %p235 = pneg %p47
      %p236 = scmp.lt.s32.totalorder %s19, 1
      %s237 = scalar_select %p236, %s19, 1
      %p238 = scmp.lt.s32.totalorder %s20, 3
      %s239 = scalar_select %p238, %s20, 3
      %s240 = smul.addr %s237, 4
      %s241 = sadd.s32 %s239, %s240
      %s242 = smul.addr %s241, 8
      %s243 = scalar_lea.vmem %s1, %s242
      %p244 = pneg %p78
      %p245 = pneg %p75
      %p246 = scmp.lt.s32.totalorder %s19, 1
      %s247 = scalar_select %p246, %s19, 1
      %p248 = scmp.lt.s32.totalorder %s20, 3
      %s249 = scalar_select %p248, %s20, 3
      %s250 = smul.addr %s247, 4
      %s251 = sadd.s32 %s249, %s250
      %s252 = smul.addr %s251, 8
      %s253 = scalar_lea.vmem %s2, %s252
      %p254 = pneg %p106
      %p255 = pneg %p103
      %p256 = scmp.lt.s32.totalorder %s19, 1
      %s257 = scalar_select %p256, %s19, 1
      %s258 = smul.addr %s257, 8
      %s259 = scalar_lea.vmem %s3, %s258
      %p260 = pneg %p132
      %p261 = pneg %p129
      %p262 = pneg %p160
      %p263 = pneg %p157
      %p264 = scmp.lt.s32.totalorder %s19, 1
      %s265 = scalar_select %p264, %s19, 1
      %p266 = scmp.lt.s32.totalorder %s20, 3
      %s267 = scalar_select %p266, %s20, 3
      %s268 = smul.addr %s265, 4
      %s269 = sadd.s32 %s267, %s268
      %s270 = smul.addr %s269, 8
      %s271 = scalar_lea.vmem %s4, %s270
      %p272 = scmp.lt.s32.totalorder %s19, 1
      %s273 = scalar_select %p272, %s19, 1
      %p274 = scmp.lt.s32.totalorder %s20, 3
      %s275 = scalar_select %p274, %s20, 3
      %s276 = smul.addr %s273, 4
      %s277 = sadd.s32 %s275, %s276
      %s278 = smul.addr %s277, 8
      %s279 = scalar_lea.vmem %s0, %s278
      %p280 = scmp.lt.s32.totalorder %s19, 1
      %s281 = scalar_select %p280, %s19, 1
      %p282 = scmp.lt.s32.totalorder %s20, 3
      %s283 = scalar_select %p282, %s20, 3
      %s284 = smul.addr %s281, 4
      %s285 = sadd.s32 %s283, %s284
      %s286 = smul.addr %s285, 8
      %s287 = scalar_lea.vmem %s1, %s286
      %p288 = scmp.lt.s32.totalorder %s19, 1
      %s289 = scalar_select %p288, %s19, 1
      %p290 = scmp.lt.s32.totalorder %s20, 3
      %s291 = scalar_select %p290, %s20, 3
      %s292 = smul.addr %s289, 4
      %s293 = sadd.s32 %s291, %s292
      %s294 = smul.addr %s293, 8
      %s295 = scalar_lea.vmem %s2, %s294
      %p296 = scmp.lt.s32.totalorder %s19, 1
      %s297 = scalar_select %p296, %s19, 1
      %s298 = smul.addr %s297, 8
      %s299 = scalar_lea.vmem %s3, %s298
      %p300 = scmp.lt.s32.totalorder %s19, 1
      %s301 = scalar_select %p300, %s19, 1
      %p302 = scmp.lt.s32.totalorder %s20, 3
      %s303 = scalar_select %p302, %s20, 3
      %s304 = smul.addr %s301, 4
      %s305 = sadd.s32 %s303, %s304
      %s306 = smul.addr %s305, 8
      %s307 = scalar_lea.vmem %s4, %s306
      %v308 = vld [vmem:[%s279] sm:$0xff]
      %v309 = vld [vmem:[%s287] sm:$0xff]
      %v310 = vld [vmem:[%s295] sm:$0xff]
      %v311 = vld [vmem:[%s299] sm:$0xff]
      %vm312 = vcmask 64512
      %v314 = vsel %vm312, %v308, 0
      %v317 = vsel %vm312, %v309, 0
      %319 = vmatprep.subr.mxu0 0.0
      %320 = vmatpush1.xpose.msra.mxu0 %v317
      %321 = vmatprep.subr.mxu0 0.0
      %322 = vmatpush1.xpose.msra.mxu0 0.0
      %323 = vmatprep.subr.mxu0 0.0
      %324 = vmatpush1.xpose.msra.mxu0 0.0
      %325 = vmatprep.subr.mxu0 0.0
      %326 = vmatpush1.xpose.msra.mxu0 0.0
      %327 = vmatprep.subr.mxu0 0.0
      %328 = vmatpush1.xpose.msra.mxu0 0.0
      %329 = vmatprep.subr.mxu0 0.0
      %330 = vmatpush1.xpose.msra.mxu0 0.0
      %331 = vmatprep.subr.mxu0 0.0
      %332 = vmatpush1.xpose.msra.mxu0 0.0
      %333 = vmatprep.subr.mxu0 0.0
      %334 = vmatpush1.xpose.msra.mxu0 0.0
      %335 = vmatprep.subr.mxu0 0.0
      %336 = vmatpush1.xpose.msra.mxu0 0.0
      %337 = vmatprep.subr.mxu0 0.0
      %338 = vmatpush1.xpose.msra.mxu0 0.0
      %339 = vmatprep.subr.mxu0 0.0
      %340 = vmatpush1.xpose.msra.mxu0 0.0
      %341 = vmatprep.subr.mxu0 0.0
      %342 = vmatpush1.xpose.msra.mxu0 0.0
      %343 = vmatprep.subr.mxu0 0.0
      %344 = vmatpush1.xpose.msra.mxu0 0.0
      %345 = vmatprep.subr.mxu0 0.0
      %346 = vmatpush1.xpose.msra.mxu0 0.0
      %347 = vmatprep.subr.mxu0 0.0
      %348 = vmatpush1.xpose.msra.mxu0 0.0
      %349 = vmatprep.subr.mxu0 0.0
      %350 = vmatpush1.xpose.msra.mxu0 0.0
      %351 = vmatprep.subr.mxu0 0.0
      %352 = vmatpush1.xpose.msra.mxu0 0.0
      %353 = vmatprep.subr.mxu0 0.0
      %354 = vmatpush1.xpose.msra.mxu0 0.0
      %355 = vmatprep.subr.mxu0 0.0
      %356 = vmatpush1.xpose.msra.mxu0 0.0
      %357 = vmatprep.subr.mxu0 0.0
      %358 = vmatpush1.xpose.msra.mxu0 0.0
      %359 = vmatprep.subr.mxu0 0.0
      %360 = vmatpush1.xpose.msra.mxu0 0.0
      %361 = vmatprep.subr.mxu0 0.0
      %362 = vmatpush1.xpose.msra.mxu0 0.0
      %363 = vmatprep.subr.mxu0 0.0
      %364 = vmatpush1.xpose.msra.mxu0 0.0
      %365 = vmatprep.subr.mxu0 0.0
      %366 = vmatpush1.xpose.msra.mxu0 0.0
      %367 = vmatprep.subr.mxu0 0.0
      %368 = vmatpush1.xpose.msra.mxu0 0.0
      %369 = vmatprep.subr.mxu0 0.0
      %370 = vmatpush1.xpose.msra.mxu0 0.0
      %371 = vmatprep.subr.mxu0 0.0
      %372 = vmatpush1.xpose.msra.mxu0 0.0
      %373 = vmatprep.subr.mxu0 0.0
      %374 = vmatpush1.xpose.msra.mxu0 0.0
      %375 = vmatprep.subr.mxu0 0.0
      %376 = vmatpush1.xpose.msra.mxu0 0.0
      %377 = vmatprep.subr.mxu0 0.0
      %378 = vmatpush1.xpose.msra.mxu0 0.0
      %379 = vmatprep.subr.mxu0 0.0
      %380 = vmatpush1.xpose.msra.mxu0 0.0
      %381 = vmatprep.subr.mxu0 0.0
      %382 = vmatpush1.xpose.msra.mxu0 0.0
      %383 = vmatprep.mubr.f32.mxu0 0.0
      %384 = vmatmul.mubr.f32.gmra.mrb[0].mxu0 %v314
      %v385 = vpop.f32.mrb[0].mxu0
      %v386 = vadd.f32 0.0, %v385
      %v387 = vpop.f32.mrb[0].mxu0
      %388 = vdwg.mxu0
      %v389 = vmul.f32 %v386, 0.35355338
      %vm390 = vcmp.ne.s32.totalorder %v311, 0
      %v391 = vsel %vm390, %v389, -1e+09
      %v392 = vsel %vm312, %v391, -inf
      %393 = vmax.xlane.f32.xlu0 %v392
      %v394 = vpop.xlane.xlu0 %393
      %v395 = vsub.f32 %v391, %v394
      %v396 = vmul.f32 %v395, 1.442695
      %v397 = vpow.pop %v396
      %v398 = vsel %vm312, %v397, 0.0
      %399 = vadd.xlane.f32.xlu0 %v398
      %v400 = vpop.xlane.xlu0 %399
      %v401 = vrcp.pop %v400
      %v402 = vmul.f32 %v397, %v401
      %v404 = vsel %vm312, %v402, 0
      %406 = vmatprep.subr.mxu0 0.0
      %407 = vmatpush1.msra.mxu0 %v310
      %408 = vmatprep.subr.mxu0 0.0
      %409 = vmatpush1.msra.mxu0 0.0
      %410 = vmatprep.subr.mxu0 0.0
      %411 = vmatpush1.msra.mxu0 0.0
      %412 = vmatprep.subr.mxu0 0.0
      %413 = vmatpush1.msra.mxu0 0.0
      %414 = vmatprep.subr.mxu0 0.0
      %415 = vmatpush1.msra.mxu0 0.0
      %416 = vmatprep.subr.mxu0 0.0
      %417 = vmatpush1.msra.mxu0 0.0
      %418 = vmatprep.subr.mxu0 0.0
      %419 = vmatpush1.msra.mxu0 0.0
      %420 = vmatprep.subr.mxu0 0.0
      %421 = vmatpush1.msra.mxu0 0.0
      %422 = vmatprep.subr.mxu0 0.0
      %423 = vmatpush1.msra.mxu0 0.0
      %424 = vmatprep.subr.mxu0 0.0
      %425 = vmatpush1.msra.mxu0 0.0
      %426 = vmatprep.subr.mxu0 0.0
      %427 = vmatpush1.msra.mxu0 0.0
      %428 = vmatprep.subr.mxu0 0.0
      %429 = vmatpush1.msra.mxu0 0.0
      %430 = vmatprep.subr.mxu0 0.0
      %431 = vmatpush1.msra.mxu0 0.0
      %432 = vmatprep.subr.mxu0 0.0
      %433 = vmatpush1.msra.mxu0 0.0
      %434 = vmatprep.subr.mxu0 0.0
      %435 = vmatpush1.msra.mxu0 0.0
      %436 = vmatprep.subr.mxu0 0.0
      %437 = vmatpush1.msra.mxu0 0.0
      %438 = vmatprep.subr.mxu0 0.0
      %439 = vmatpush1.msra.mxu0 0.0
      %440 = vmatprep.subr.mxu0 0.0
      %441 = vmatpush1.msra.mxu0 0.0
      %442 = vmatprep.subr.mxu0 0.0
      %443 = vmatpush1.msra.mxu0 0.0
      %444 = vmatprep.subr.mxu0 0.0
      %445 = vmatpush1.msra.mxu0 0.0
      %446 = vmatprep.subr.mxu0 0.0
      %447 = vmatpush1.msra.mxu0 0.0
      %448 = vmatprep.subr.mxu0 0.0
      %449 = vmatpush1.msra.mxu0 0.0
      %450 = vmatprep.subr.mxu0 0.0
      %451 = vmatpush1.msra.mxu0 0.0
      %452 = vmatprep.subr.mxu0 0.0
      %453 = vmatpush1.msra.mxu0 0.0
      %454 = vmatprep.subr.mxu0 0.0
      %455 = vmatpush1.msra.mxu0 0.0
      %456 = vmatprep.subr.mxu0 0.0
      %457 = vmatpush1.msra.mxu0 0.0
      %458 = vmatprep.subr.mxu0 0.0
      %459 = vmatpush1.msra.mxu0 0.0
      %460 = vmatprep.subr.mxu0 0.0
      %461 = vmatpush1.msra.mxu0 0.0
      %462 = vmatprep.subr.mxu0 0.0
      %463 = vmatpush1.msra.mxu0 0.0
      %464 = vmatprep.subr.mxu0 0.0
      %465 = vmatpush1.msra.mxu0 0.0
      %466 = vmatprep.subr.mxu0 0.0
      %467 = vmatpush1.msra.mxu0 0.0
      %468 = vmatprep.subr.mxu0 0.0
      %469 = vmatpush1.msra.mxu0 0.0
      %470 = vmatprep.mubr.f32.mxu0 0.0
      %471 = vmatmul.mubr.f32.gmra.mrb[0].mxu0 %v404
      %v472 = vpop.f32.mrb[0].mxu0
      %v473 = vadd.f32 0.0, %v472
      %v474 = vpop.f32.mrb[0].mxu0
      %475 = vdwg.mxu0
      %476 = vst.msk [vmem:[%s307] sm:$0xff] %vm312, %v473
      %p477 = scmp.lt.s32.totalorder %s19, 1
      %s478 = scalar_select %p477, %s19, 1
      %p479 = scmp.lt.s32.totalorder %s20, 3
      %s480 = scalar_select %p479, %s20, 3
      %s481 = smul.addr %s478, 4
      %s482 = sadd.s32 %s480, %s481
      %s483 = smul.addr %s482, 8
      %s484 = scalar_lea.vmem %s4, %s483
      // Predicated region
      $region37: #{decoder_layer_forward.18} parent=35 // pred_check
        %p485 = pneg %p157
      $region38: #{decoder_layer_forward.18} parent=35 // pred_check_branch
        %487 = sbr.rel (%p485) target = $region40
      $region39: #{decoder_layer_forward.18} parent=35 // pred_region
        _
      $region40: #{decoder_layer_forward.18} parent=35 // pred_fallthru
        _
    $region36: #{decoder_layer_forward.18} parent=5 // pred_fallthru
      _
    %p488 = scmp.le.s32.totalorder 2, %s10
    // Predicated region
    $region41: #{decoder_layer_forward.18} parent=5 // pred_check
      %p489 = pneg %p488
    $region42: #{decoder_layer_forward.18} parent=5 // pred_check_branch
      %491 = sbr.rel (%p489) target = $region44
    $region43: #{decoder_layer_forward.18} parent=5 // pred_region
      %s492 = ssub.s32 %s10, 2
      // Predicated region
      $region45: #{decoder_layer_forward.18} parent=43 // pred_check
        %p493 = pneg %p163
      $region46: #{decoder_layer_forward.18} parent=43 // pred_check_branch
        %495 = sbr.rel (%p493) target = $region48
      $region47: #{decoder_layer_forward.18} parent=43 // pred_region
        %p496 = scmp.lt.s32.totalorder %s21, 1
        %s497 = scalar_select %p496, %s21, 1
        %p498 = scmp.lt.s32.totalorder %s22, 3
        %s499 = scalar_select %p498, %s22, 3
        %s500 = smul.addr %s497, 4
        %s501 = sadd.s32 %s499, %s500
        %s502 = smul.addr %s501, 8
        %s503 = scalar_lea.vmem %s4, %s502
      $region48: #{decoder_layer_forward.18} parent=43 // pred_fallthru
        _
    $region44: #{decoder_layer_forward.18} parent=5 // pred_fallthru
      _
  $region6: #{decoder_layer_forward.18} parent=0 // loop_footer
    %s14 = sadd.s32 1, %s10
  $region7: #{decoder_layer_forward.18} parent=0 // loop_footer_branch
    %9 = sbr.rel target = $region3
  $region8: #{decoder_layer_forward.18} parent=0 // loop_exit
    _

// kernel: decoder_layer_forward.19
$region0: #{decoder_layer_forward.19}
  #allocation0 [shape = 'u32[]', space=smem, size = 0x4, offset = 0x4, fixed_abs, tag = 'smem constant byte address 0x4 - core index']
  #allocation1 [shape = 'u32[144,128]{1,0:T(1,128)}', space=vmem, size = 0x12000, scoped, tag = 'internal scratch']
  %s0 = inlined_call_operand.vmem [shape: f32[16,32], index: 0, kind: input, shape index: {}]
  %s1 = inlined_call_operand.vmem [shape: f32[32,32], index: 1, kind: input, shape index: {}]
  %s2 = inlined_call_operand.vmem [shape: f32[1,32], index: 2, kind: input, shape index: {}]
  %s3 = inlined_call_operand.vmem [shape: f32[16,32], index: 3, kind: input, shape index: {}]
  %s4 = inlined_call_operand.vmem [shape: f32[16,32], index: 4, kind: output, shape index: {}]
  %s5 = sld [smem:[#allocation0]]
  $region49: #{decoder_layer_forward.19} parent=0
    _
  %s7 = ssub.s32 1, %s5
  %s8 = scalar_select 0, %s7, %s5
  loop: start=0, step=1, limit=4
  $region2: #{decoder_layer_forward.19} parent=0 // loop_pre_header
    _
  $region3: #{decoder_layer_forward.19} parent=0 // loop_header
    %s10 = sphi 0, %s14
    %p11 = scmp.ge.s32.totalorder %s10, 4
    %s20 = sphi 0, %s22
    %s23 = sphi 0, %s20
    %s24 = sphi 0, %s23
    %s40 = sphi 0, %s24
    %s44 = sphi 0, %s44
    %s46 = sphi 0, %s44
    %s47 = sphi 0, %s46
    %s61 = sphi 0, %s47
    %s65 = sphi 0, %s65
    %s67 = sphi 0, %s65
    %s68 = sphi 0, %s67
    %s82 = sphi 0, %s68
    %s88 = sphi 0, %s90
    %s91 = sphi 0, %s88
    %s92 = sphi 0, %s91
    %s108 = sphi 0, %s92
    %s114 = sphi 0, %s116
    %s117 = sphi 0, %s114
    %s118 = sphi 0, %s117
    %s134 = sphi 0, %s118
  $region4: #{decoder_layer_forward.19} parent=0 // loop_header_branch
    %13 = sbr.rel (%p11) target = $region8
  $region5: #{decoder_layer_forward.19} parent=0 // loop_body
    %s15 = ssub.s32 %s10, 1
    %s16 = ssub.s32 %s10, 2
    %s17 = sadd.s32 %s10, 1
    %s18 = ssub.s32 %s10, %s17
    %p19 = scmp.eq.s32.totalorder %s18, 0
    %s21 = sadd.s32 %s20, 1
    %s22 = scalar_select %p19, %s20, %s21
    %p25 = pneg %p19
    %p26 = scmp.eq.s32.totalorder %s10, 1
    %p27 = por %p25, %p26
    %p28 = scmp.ne.s32.totalorder %s20, %s23
    %p29 = scmp.eq.s32.totalorder %s10, 0
    %p30 = por %p28, %p29
    %p31 = scmp.ne.s32.totalorder %s20, %s23
    %p32 = scmp.eq.s32.totalorder %s15, 1
    %p33 = por %p31, %p32
    %p34 = scmp.ne.s32.totalorder %s23, %s24
    %p35 = scmp.eq.s32.totalorder %s15, 0
    %p36 = por %p34, %p35
    %p37 = scmp.ne.s32.totalorder %s23, %s24
    %p38 = scmp.eq.s32.totalorder %s16, 1
    %p39 = por %p37, %p38
    %p41 = scmp.ne.s32.totalorder %s24, %s40
    %p42 = scmp.eq.s32.totalorder %s16, 0
    %p43 = por %p41, %p42
    %s45 = sadd.s32 %s44, 1
    %p48 = scmp.eq.s32.totalorder %s10, 1
    %p49 = scmp.ne.s32.totalorder %s44, %s46
    %p50 = scmp.eq.s32.totalorder %s10, 0
    %p51 = por %p49, %p50
    %p52 = scmp.ne.s32.totalorder %s44, %s46
    %p53 = scmp.eq.s32.totalorder %s15, 1
    %p54 = por %p52, %p53
    %p55 = scmp.ne.s32.totalorder %s46, %s47
    %p56 = scmp.eq.s32.totalorder %s15, 0
    %p57 = por %p55, %p56
    %p58 = scmp.ne.s32.totalorder %s46, %s47
    %p59 = scmp.eq.s32.totalorder %s16, 1
    %p60 = por %p58, %p59
    %p62 = scmp.ne.s32.totalorder %s47, %s61
    %p63 = scmp.eq.s32.totalorder %s16, 0
    %p64 = por %p62, %p63
    %s66 = sadd.s32 %s65, 1
    %p69 = scmp.eq.s32.totalorder %s10, 1
    %p70 = scmp.ne.s32.totalorder %s65, %s67
    %p71 = scmp.eq.s32.totalorder %s10, 0
    %p72 = por %p70, %p71
    %p73 = scmp.ne.s32.totalorder %s65, %s67
    %p74 = scmp.eq.s32.totalorder %s15, 1
    %p75 = por %p73, %p74
    %p76 = scmp.ne.s32.totalorder %s67, %s68
    %p77 = scmp.eq.s32.totalorder %s15, 0
    %p78 = por %p76, %p77
    %p79 = scmp.ne.s32.totalorder %s67, %s68
    %p80 = scmp.eq.s32.totalorder %s16, 1
    %p81 = por %p79, %p80
    %p83 = scmp.ne.s32.totalorder %s68, %s82
    %p84 = scmp.eq.s32.totalorder %s16, 0
    %p85 = por %p83, %p84
    %s86 = ssub.s32 %s10, %s17
    %p87 = scmp.eq.s32.totalorder %s86, 0
    %s89 = sadd.s32 %s88, 1
    %s90 = scalar_select %p87, %s88, %s89
    %p93 = pneg %p87
    %p94 = scmp.eq.s32.totalorder %s10, 1
    %p95 = por %p93, %p94
    %p96 = scmp.ne.s32.totalorder %s88, %s91
    %p97 = scmp.eq.s32.totalorder %s10, 0
    %p98 = por %p96, %p97
    %p99 = scmp.ne.s32.totalorder %s88, %s91
    %p100 = scmp.eq.s32.totalorder %s15, 1
    %p101 = por %p99, %p100
    %p102 = scmp.ne.s32.totalorder %s91, %s92
    %p103 = scmp.eq.s32.totalorder %s15, 0
    %p104 = por %p102, %p103
    %p105 = scmp.ne.s32.totalorder %s91, %s92
    %p106 = scmp.eq.s32.totalorder %s16, 1
    %p107 = por %p105, %p106
    %p109 = scmp.ne.s32.totalorder %s92, %s108
    %p110 = scmp.eq.s32.totalorder %s16, 0
    %p111 = por %p109, %p110
    %s112 = ssub.s32 %s10, %s17
    %p113 = scmp.eq.s32.totalorder %s112, 0
    %s115 = sadd.s32 %s114, 1
    %s116 = scalar_select %p113, %s114, %s115
    %p119 = pneg %p113
    %p120 = scmp.eq.s32.totalorder %s10, 1
    %p121 = por %p119, %p120
    %p122 = scmp.ne.s32.totalorder %s114, %s117
    %p123 = scmp.eq.s32.totalorder %s10, 0
    %p124 = por %p122, %p123
    %p125 = scmp.ne.s32.totalorder %s114, %s117
    %p126 = scmp.eq.s32.totalorder %s15, 1
    %p127 = por %p125, %p126
    %p128 = scmp.ne.s32.totalorder %s117, %s118
    %p129 = scmp.eq.s32.totalorder %s15, 0
    %p130 = por %p128, %p129
    %p131 = scmp.ne.s32.totalorder %s117, %s118
    %p132 = scmp.eq.s32.totalorder %s16, 1
    %p133 = por %p131, %p132
    %p135 = scmp.ne.s32.totalorder %s118, %s134
    %p136 = scmp.eq.s32.totalorder %s16, 0
    %p137 = por %p135, %p136
    %p138 = scmp.le.s32.totalorder 1, %s10
    %p139 = scmp.lt.s32.totalorder %s10, 3
    %p140 = pnand %p138, %p139
    %p141 = pneg %p140
    // Predicated region
    $region9: #{decoder_layer_forward.19} parent=5 // pred_check
      _
    $region10: #{decoder_layer_forward.19} parent=5 // pred_check_branch
      %143 = sbr.rel (%p140) target = $region12
    $region11: #{decoder_layer_forward.19} parent=5 // pred_region
      %s144 = ssub.s32 %s10, 1
      // Predicated region
      $region13: #{decoder_layer_forward.19} parent=11 // pred_check
        %p145 = pneg %p57
      $region14: #{decoder_layer_forward.19} parent=11 // pred_check_branch
        %147 = sbr.rel (%p145) target = $region16
      $region15: #{decoder_layer_forward.19} parent=11 // pred_region
        _
      $region16: #{decoder_layer_forward.19} parent=11 // pred_fallthru
        _
      // Predicated region
      $region17: #{decoder_layer_forward.19} parent=11 // pred_check
        %p148 = pneg %p78
      $region18: #{decoder_layer_forward.19} parent=11 // pred_check_branch
        %150 = sbr.rel (%p148) target = $region20
      $region19: #{decoder_layer_forward.19} parent=11 // pred_region
        _
      $region20: #{decoder_layer_forward.19} parent=11 // pred_fallthru
        _
    $region12: #{decoder_layer_forward.19} parent=5 // pred_fallthru
      _
    %p151 = scmp.lt.s32.totalorder %s10, 2
    // Predicated region
    $region21: #{decoder_layer_forward.19} parent=5 // pred_check
      %p152 = pneg %p151
    $region22: #{decoder_layer_forward.19} parent=5 // pred_check_branch
      %154 = sbr.rel (%p152) target = $region24
    $region23: #{decoder_layer_forward.19} parent=5 // pred_region
      // Predicated region
      $region25: #{decoder_layer_forward.19} parent=23 // pred_check
        %p155 = pneg %p30
      $region26: #{decoder_layer_forward.19} parent=23 // pred_check_branch
        %157 = sbr.rel (%p155) target = $region28
      $region27: #{decoder_layer_forward.19} parent=23 // pred_region
        %p158 = scmp.lt.s32.totalorder %s10, 1
        %s159 = scalar_select %p158, %s10, 1
        %s160 = smul.addr %s159, 8
        %s161 = scalar_lea.vmem %s0, %s160
      $region28: #{decoder_layer_forward.19} parent=23 // pred_fallthru
        _
      // Predicated region
      $region29: #{decoder_layer_forward.19} parent=23 // pred_check
        %p162 = pneg %p98
      $region30: #{decoder_layer_forward.19} parent=23 // pred_check_branch
        %164 = sbr.rel (%p162) target = $region32
      $region31: #{decoder_layer_forward.19} parent=23 // pred_region
        %p165 = scmp.lt.s32.totalorder %s10, 1
        %s166 = scalar_select %p165, %s10, 1
        %s167 = smul.addr %s166, 8
        %s168 = scalar_lea.vmem %s3, %s167
      $region32: #{decoder_layer_forward.19} parent=23 // pred_fallthru
        _
    $region24: #{decoder_layer_forward.19} parent=5 // pred_fallthru
      _
    %p169 = scmp.le.s32.totalorder 1, %s10
    %p170 = scmp.lt.s32.totalorder %s10, 3
    %p171 = pnand %p169, %p170
    %p172 = pneg %p171
    // Predicated region
    $region33: #{decoder_layer_forward.19} parent=5 // pred_check
      _
    $region34: #{decoder_layer_forward.19} parent=5 // pred_check_branch
      %174 = sbr.rel (%p171) target = $region36
    $region35: #{decoder_layer_forward.19} parent=5 // pred_region
      %s175 = ssub.s32 %s10, 1
      %p176 = scmp.lt.s32.totalorder %s15, 1
      %s177 = scalar_select %p176, %s15, 1
      %s178 = smul.addr %s177, 8
      %s179 = scalar_lea.vmem %s0, %s178
      %p180 = pneg %p36
      %p181 = pneg %p33
      %p182 = pneg %p57
      %p183 = pneg %p54
      %p184 = pneg %p78
      %p185 = pneg %p75
      %p186 = scmp.lt.s32.totalorder %s15, 1
      %s187 = scalar_select %p186, %s15, 1
      %s188 = smul.addr %s187, 8
      %s189 = scalar_lea.vmem %s3, %s188
      %p190 = pneg %p104
      %p191 = pneg %p101
      %p192 = pneg %p130
      %p193 = pneg %p127
      %p194 = scmp.lt.s32.totalorder %s15, 1
      %s195 = scalar_select %p194, %s15, 1
      %s196 = smul.addr %s195, 8
      %s197 = scalar_lea.vmem %s4, %s196
      %p198 = scmp.lt.s32.totalorder %s15, 1
      %s199 = scalar_select %p198, %s15, 1
      %s200 = smul.addr %s199, 8
      %s201 = scalar_lea.vmem %s0, %s200
      %p202 = scmp.lt.s32.totalorder %s15, 1
      %s203 = scalar_select %p202, %s15, 1
      %s204 = smul.addr %s203, 8
      %s205 = scalar_lea.vmem %s3, %s204
      %p206 = scmp.lt.s32.totalorder %s15, 1
      %s207 = scalar_select %p206, %s15, 1
      %s208 = smul.addr %s207, 8
      %s209 = scalar_lea.vmem %s4, %s208
      %v210 = vld [vmem:[%s201] sm:$0xff]
      %v211 = vld [vmem:[%s1] sm:$0xff]
      %v212 = vld [vmem:[%s1 + $0x8] sm:$0xff]
      %v213 = vld [vmem:[%s1 + $0x10] sm:$0xff]
      %v214 = vld [vmem:[%s1 + $0x18] sm:$0xff]
      %v215 = vld [vmem:[%s2] sm:$0x1]
      %v217 = vlaneseq
      %v218 = vshrl.u32 %v217, 7
      %v219 = vsub.s32 0, %v218
      %v220 = vrot.slane %v215, %v219
      %vm222 = vcmask 261120
      %v224 = vsel %vm222, %v210, 0
      %226 = vmatprep.subr.mxu0 0.0
      %227 = vmatpush1.msra.mxu0 %v211
      %228 = vmatprep.subr.mxu0 0.0
      %229 = vmatpush1.msra.mxu0 %v212
      %230 = vmatprep.subr.mxu0 0.0
      %231 = vmatpush1.msra.mxu0 %v213
      %232 = vmatprep.subr.mxu0 0.0
      %233 = vmatpush1.msra.mxu0 %v214
      %234 = vmatprep.subr.mxu0 0.0
      %235 = vmatpush1.msra.mxu0 0.0
      %236 = vmatprep.subr.mxu0 0.0
      %237 = vmatpush1.msra.mxu0 0.0
      %238 = vmatprep.subr.mxu0 0.0
      %239 = vmatpush1.msra.mxu0 0.0
      %240 = vmatprep.subr.mxu0 0.0
      %241 = vmatpush1.msra.mxu0 0.0
      %242 = vmatprep.subr.mxu0 0.0
      %243 = vmatpush1.msra.mxu0 0.0
      %244 = vmatprep.subr.mxu0 0.0
      %245 = vmatpush1.msra.mxu0 0.0
      %246 = vmatprep.subr.mxu0 0.0
      %247 = vmatpush1.msra.mxu0 0.0
      %248 = vmatprep.subr.mxu0 0.0
      %249 = vmatpush1.msra.mxu0 0.0
      %250 = vmatprep.subr.mxu0 0.0
      %251 = vmatpush1.msra.mxu0 0.0
      %252 = vmatprep.subr.mxu0 0.0
      %253 = vmatpush1.msra.mxu0 0.0
      %254 = vmatprep.subr.mxu0 0.0
      %255 = vmatpush1.msra.mxu0 0.0
      %256 = vmatprep.subr.mxu0 0.0
      %257 = vmatpush1.msra.mxu0 0.0
      %258 = vmatprep.subr.mxu0 0.0
      %259 = vmatpush1.msra.mxu0 0.0
      %260 = vmatprep.subr.mxu0 0.0
      %261 = vmatpush1.msra.mxu0 0.0
      %262 = vmatprep.subr.mxu0 0.0
      %263 = vmatpush1.msra.mxu0 0.0
      %264 = vmatprep.subr.mxu0 0.0
      %265 = vmatpush1.msra.mxu0 0.0
      %266 = vmatprep.subr.mxu0 0.0
      %267 = vmatpush1.msra.mxu0 0.0
      %268 = vmatprep.subr.mxu0 0.0
      %269 = vmatpush1.msra.mxu0 0.0
      %270 = vmatprep.subr.mxu0 0.0
      %271 = vmatpush1.msra.mxu0 0.0
      %272 = vmatprep.subr.mxu0 0.0
      %273 = vmatpush1.msra.mxu0 0.0
      %274 = vmatprep.subr.mxu0 0.0
      %275 = vmatpush1.msra.mxu0 0.0
      %276 = vmatprep.subr.mxu0 0.0
      %277 = vmatpush1.msra.mxu0 0.0
      %278 = vmatprep.subr.mxu0 0.0
      %279 = vmatpush1.msra.mxu0 0.0
      %280 = vmatprep.subr.mxu0 0.0
      %281 = vmatpush1.msra.mxu0 0.0
      %282 = vmatprep.subr.mxu0 0.0
      %283 = vmatpush1.msra.mxu0 0.0
      %284 = vmatprep.subr.mxu0 0.0
      %285 = vmatpush1.msra.mxu0 0.0
      %286 = vmatprep.subr.mxu0 0.0
      %287 = vmatpush1.msra.mxu0 0.0
      %288 = vmatprep.subr.mxu0 0.0
      %289 = vmatpush1.msra.mxu0 0.0
      %290 = vmatprep.mubr.f32.mxu0 0.0
      %291 = vmatmul.mubr.f32.gmra.mrb[0].mxu0 %v224
      %v292 = vpop.f32.mrb[0].mxu0
      %v293 = vadd.f32 %v220, %v292
      %v294 = vpop.f32.mrb[0].mxu0
      %295 = vdwg.mxu0
      %v296 = vld [vmem:[%s205] sm:$0xff]
      %v297 = vadd.f32 %v293, %v296
      %298 = vst.msk [vmem:[%s209] sm:$0xff] %vm222, %v297
      %p299 = scmp.lt.s32.totalorder %s15, 1
      %s300 = scalar_select %p299, %s15, 1
      %s301 = smul.addr %s300, 8
      %s302 = scalar_lea.vmem %s4, %s301
      // Predicated region
      $region37: #{decoder_layer_forward.19} parent=35 // pred_check
        %p303 = pneg %p127
      $region38: #{decoder_layer_forward.19} parent=35 // pred_check_branch
        %305 = sbr.rel (%p303) target = $region40
      $region39: #{decoder_layer_forward.19} parent=35 // pred_region
        _
      $region40: #{decoder_layer_forward.19} parent=35 // pred_fallthru
        _
    $region36: #{decoder_layer_forward.19} parent=5 // pred_fallthru
      _
    %p306 = scmp.le.s32.totalorder 2, %s10
    // Predicated region
    $region41: #{decoder_layer_forward.19} parent=5 // pred_check
      %p307 = pneg %p306
    $region42: #{decoder_layer_forward.19} parent=5 // pred_check_branch
      %309 = sbr.rel (%p307) target = $region44
    $region43: #{decoder_layer_forward.19} parent=5 // pred_region
      %s310 = ssub.s32 %s10, 2
      // Predicated region
      $region45: #{decoder_layer_forward.19} parent=43 // pred_check
        %p311 = pneg %p133
      $region46: #{decoder_layer_forward.19} parent=43 // pred_check_branch
        %313 = sbr.rel (%p311) target = $region48
      $region47: #{decoder_layer_forward.19} parent=43 // pred_region
        %p314 = scmp.lt.s32.totalorder %s16, 1
        %s315 = scalar_select %p314, %s16, 1
        %s316 = smul.addr %s315, 8
        %s317 = scalar_lea.vmem %s4, %s316
      $region48: #{decoder_layer_forward.19} parent=43 // pred_fallthru
        _
    $region44: #{decoder_layer_forward.19} parent=5 // pred_fallthru
      _
  $region6: #{decoder_layer_forward.19} parent=0 // loop_footer
    %s14 = sadd.s32 1, %s10
  $region7: #{decoder_layer_forward.19} parent=0 // loop_footer_branch
    %9 = sbr.rel target = $region3
  $region8: #{decoder_layer_forward.19} parent=0 // loop_exit
    _

// kernel: decoder_layer_forward.27
$region0: #{decoder_layer_forward.27}
  #allocation0 [shape = 'u32[]', space=smem, size = 0x4, offset = 0x4, fixed_abs, tag = 'smem constant byte address 0x4 - core index']
  #allocation1 [shape = 'u32[144,128]{1,0:T(1,128)}', space=vmem, size = 0x12000, scoped, tag = 'internal scratch']
  %s0 = inlined_call_operand.vmem [shape: f32[16,32], index: 0, kind: input, shape index: {}]
  %s1 = inlined_call_operand.vmem [shape: f32[32,64], index: 1, kind: input, shape index: {}]
  %s2 = inlined_call_operand.vmem [shape: f32[1,64], index: 2, kind: input, shape index: {}]
  %s3 = inlined_call_operand.vmem [shape: f32[64,32], index: 3, kind: input, shape index: {}]
  %s4 = inlined_call_operand.vmem [shape: f32[1,32], index: 4, kind: input, shape index: {}]
  %s5 = inlined_call_operand.vmem [shape: f32[16,32], index: 5, kind: input, shape index: {}]
  %s6 = inlined_call_operand.hbm [shape: f32[16,32], index: 6, kind: output, shape index: {}]
  %s7 = sld [smem:[#allocation0]]
  $region57: #{decoder_layer_forward.27} parent=0
    _
  %s9 = ssub.s32 1, %s7
  %s10 = scalar_select 0, %s9, %s7
  $region1: #{decoder_layer_forward.27} parent=0
    #allocation2 [shape = 'u8[8192]{0}', space=vmem, size = 0x2000, scoped, tag = 'output window, operand 0']
    #allocation3 [shape = 's32[2]{0}', space=sflag, size = 0x8, scoped, tag = 'scoped memory for decoder_layer_forward.27']
    %11 = vsyncpa [#allocation3], 0
    %s12 = scalar_lea.sflag [#allocation3], 1
    %13 = vsyncpa %s12, 0
    loop: start=0, step=1, limit=4
    $region2: #{decoder_layer_forward.27} parent=1 // loop_pre_header
      _
    $region3: #{decoder_layer_forward.27} parent=1 // loop_header
      %s15 = sphi 0, %s19
      %p16 = scmp.ge.s32.totalorder %s15, 4
      %s25 = sphi 0, %s27
      %s28 = sphi 0, %s25
      %s29 = sphi 0, %s28
      %s45 = sphi 0, %s29
      %s49 = sphi 0, %s49
      %s51 = sphi 0, %s49
      %s52 = sphi 0, %s51
      %s66 = sphi 0, %s52
      %s70 = sphi 0, %s70
      %s72 = sphi 0, %s70
      %s73 = sphi 0, %s72
      %s87 = sphi 0, %s73
      %s91 = sphi 0, %s91
      %s93 = sphi 0, %s91
      %s94 = sphi 0, %s93
      %s108 = sphi 0, %s94
      %s112 = sphi 0, %s112
      %s114 = sphi 0, %s112
      %s115 = sphi 0, %s114
      %s129 = sphi 0, %s115
      %s135 = sphi 0, %s137
      %s138 = sphi 0, %s135
      %s139 = sphi 0, %s138
      %s155 = sphi 0, %s139
      %s161 = sphi 0, %s163
      %s164 = sphi 0, %s161
      %s165 = sphi 0, %s164
      %s181 = sphi 0, %s165
    $region4: #{decoder_layer_forward.27} parent=1 // loop_header_branch
      %18 = sbr.rel (%p16) target = $region8
    $region5: #{decoder_layer_forward.27} parent=1 // loop_body
      %s20 = ssub.s32 %s15, 1
      %s21 = ssub.s32 %s15, 2
      %s22 = sadd.s32 %s15, 1
      %s23 = ssub.s32 %s15, %s22
      %p24 = scmp.eq.s32.totalorder %s23, 0
      %s26 = sadd.s32 %s25, 1
      %s27 = scalar_select %p24, %s25, %s26
      %p30 = pneg %p24
      %p31 = scmp.eq.s32.totalorder %s15, 1
      %p32 = por %p30, %p31
      %p33 = scmp.ne.s32.totalorder %s25, %s28
      %p34 = scmp.eq.s32.totalorder %s15, 0
      %p35 = por %p33, %p34
      %p36 = scmp.ne.s32.totalorder %s25, %s28
      %p37 = scmp.eq.s32.totalorder %s20, 1
      %p38 = por %p36, %p37
      %p39 = scmp.ne.s32.totalorder %s28, %s29
      %p40 = scmp.eq.s32.totalorder %s20, 0
      %p41 = por %p39, %p40
      %p42 = scmp.ne.s32.totalorder %s28, %s29
      %p43 = scmp.eq.s32.totalorder %s21, 1
      %p44 = por %p42, %p43
      %p46 = scmp.ne.s32.totalorder %s29, %s45
      %p47 = scmp.eq.s32.totalorder %s21, 0
      %p48 = por %p46, %p47
      %s50 = sadd.s32 %s49, 1
      %p53 = scmp.eq.s32.totalorder %s15, 1
      %p54 = scmp.ne.s32.totalorder %s49, %s51
      %p55 = scmp.eq.s32.totalorder %s15, 0
      %p56 = por %p54, %p55
      %p57 = scmp.ne.s32.totalorder %s49, %s51
      %p58 = scmp.eq.s32.totalorder %s20, 1
      %p59 = por %p57, %p58
      %p60 = scmp.ne.s32.totalorder %s51, %s52
      %p61 = scmp.eq.s32.totalorder %s20, 0
      %p62 = por %p60, %p61
      %p63 = scmp.ne.s32.totalorder %s51, %s52
      %p64 = scmp.eq.s32.totalorder %s21, 1
      %p65 = por %p63, %p64
      %p67 = scmp.ne.s32.totalorder %s52, %s66
      %p68 = scmp.eq.s32.totalorder %s21, 0
      %p69 = por %p67, %p68
      %s71 = sadd.s32 %s70, 1
      %p74 = scmp.eq.s32.totalorder %s15, 1
      %p75 = scmp.ne.s32.totalorder %s70, %s72
      %p76 = scmp.eq.s32.totalorder %s15, 0
      %p77 = por %p75, %p76
      %p78 = scmp.ne.s32.totalorder %s70, %s72
      %p79 = scmp.eq.s32.totalorder %s20, 1
      %p80 = por %p78, %p79
      %p81 = scmp.ne.s32.totalorder %s72, %s73
      %p82 = scmp.eq.s32.totalorder %s20, 0
      %p83 = por %p81, %p82
      %p84 = scmp.ne.s32.totalorder %s72, %s73
      %p85 = scmp.eq.s32.totalorder %s21, 1
      %p86 = por %p84, %p85
      %p88 = scmp.ne.s32.totalorder %s73, %s87
      %p89 = scmp.eq.s32.totalorder %s21, 0
      %p90 = por %p88, %p89
      %s92 = sadd.s32 %s91, 1
      %p95 = scmp.eq.s32.totalorder %s15, 1
      %p96 = scmp.ne.s32.totalorder %s91, %s93
      %p97 = scmp.eq.s32.totalorder %s15, 0
      %p98 = por %p96, %p97
      %p99 = scmp.ne.s32.totalorder %s91, %s93
      %p100 = scmp.eq.s32.totalorder %s20, 1
      %p101 = por %p99, %p100
      %p102 = scmp.ne.s32.totalorder %s93, %s94
      %p103 = scmp.eq.s32.totalorder %s20, 0
      %p104 = por %p102, %p103
      %p105 = scmp.ne.s32.totalorder %s93, %s94
      %p106 = scmp.eq.s32.totalorder %s21, 1
      %p107 = por %p105, %p106
      %p109 = scmp.ne.s32.totalorder %s94, %s108
      %p110 = scmp.eq.s32.totalorder %s21, 0
      %p111 = por %p109, %p110
      %s113 = sadd.s32 %s112, 1
      %p116 = scmp.eq.s32.totalorder %s15, 1
      %p117 = scmp.ne.s32.totalorder %s112, %s114
      %p118 = scmp.eq.s32.totalorder %s15, 0
      %p119 = por %p117, %p118
      %p120 = scmp.ne.s32.totalorder %s112, %s114
      %p121 = scmp.eq.s32.totalorder %s20, 1
      %p122 = por %p120, %p121
      %p123 = scmp.ne.s32.totalorder %s114, %s115
      %p124 = scmp.eq.s32.totalorder %s20, 0
      %p125 = por %p123, %p124
      %p126 = scmp.ne.s32.totalorder %s114, %s115
      %p127 = scmp.eq.s32.totalorder %s21, 1
      %p128 = por %p126, %p127
      %p130 = scmp.ne.s32.totalorder %s115, %s129
      %p131 = scmp.eq.s32.totalorder %s21, 0
      %p132 = por %p130, %p131
      %s133 = ssub.s32 %s15, %s22
      %p134 = scmp.eq.s32.totalorder %s133, 0
      %s136 = sadd.s32 %s135, 1
      %s137 = scalar_select %p134, %s135, %s136
      %p140 = pneg %p134
      %p141 = scmp.eq.s32.totalorder %s15, 1
      %p142 = por %p140, %p141
      %p143 = scmp.ne.s32.totalorder %s135, %s138
      %p144 = scmp.eq.s32.totalorder %s15, 0
      %p145 = por %p143, %p144
      %p146 = scmp.ne.s32.totalorder %s135, %s138
      %p147 = scmp.eq.s32.totalorder %s20, 1
      %p148 = por %p146, %p147
      %p149 = scmp.ne.s32.totalorder %s138, %s139
      %p150 = scmp.eq.s32.totalorder %s20, 0
      %p151 = por %p149, %p150
      %p152 = scmp.ne.s32.totalorder %s138, %s139
      %p153 = scmp.eq.s32.totalorder %s21, 1
      %p154 = por %p152, %p153
      %p156 = scmp.ne.s32.totalorder %s139, %s155
      %p157 = scmp.eq.s32.totalorder %s21, 0
      %p158 = por %p156, %p157
      %s159 = ssub.s32 %s15, %s22
      %p160 = scmp.eq.s32.totalorder %s159, 0
      %s162 = sadd.s32 %s161, 1
      %s163 = scalar_select %p160, %s161, %s162
      %p166 = pneg %p160
      %p167 = scmp.eq.s32.totalorder %s15, 1
      %p168 = por %p166, %p167
      %p169 = scmp.ne.s32.totalorder %s161, %s164
      %p170 = scmp.eq.s32.totalorder %s15, 0
      %p171 = por %p169, %p170
      %p172 = scmp.ne.s32.totalorder %s161, %s164
      %p173 = scmp.eq.s32.totalorder %s20, 1
      %p174 = por %p172, %p173
      %p175 = scmp.ne.s32.totalorder %s164, %s165
      %p176 = scmp.eq.s32.totalorder %s20, 0
      %p177 = por %p175, %p176
      %p178 = scmp.ne.s32.totalorder %s164, %s165
      %p179 = scmp.eq.s32.totalorder %s21, 1
      %p180 = por %p178, %p179
      %p182 = scmp.ne.s32.totalorder %s165, %s181
      %p183 = scmp.eq.s32.totalorder %s21, 0
      %p184 = por %p182, %p183
      %p185 = scmp.le.s32.totalorder 1, %s15
      %p186 = scmp.lt.s32.totalorder %s15, 3
      %p187 = pnand %p185, %p186
      %p188 = pneg %p187
      // Predicated region
      $region9: #{decoder_layer_forward.27} parent=5 // pred_check
        _
      $region10: #{decoder_layer_forward.27} parent=5 // pred_check_branch
        %190 = sbr.rel (%p187) target = $region12
      $region11: #{decoder_layer_forward.27} parent=5 // pred_region
        %s191 = ssub.s32 %s15, 1
        // Predicated region
        $region13: #{decoder_layer_forward.27} parent=11 // pred_check
          %p192 = pneg %p62
        $region14: #{decoder_layer_forward.27} parent=11 // pred_check_branch
          %194 = sbr.rel (%p192) target = $region16
        $region15: #{decoder_layer_forward.27} parent=11 // pred_region
          _
        $region16: #{decoder_layer_forward.27} parent=11 // pred_fallthru
          _
        // Predicated region
        $region17: #{decoder_layer_forward.27} parent=11 // pred_check
          %p195 = pneg %p83
        $region18: #{decoder_layer_forward.27} parent=11 // pred_check_branch
          %197 = sbr.rel (%p195) target = $region20
        $region19: #{decoder_layer_forward.27} parent=11 // pred_region
          _
        $region20: #{decoder_layer_forward.27} parent=11 // pred_fallthru
          _
        // Predicated region
        $region21: #{decoder_layer_forward.27} parent=11 // pred_check
          %p198 = pneg %p104
        $region22: #{decoder_layer_forward.27} parent=11 // pred_check_branch
          %200 = sbr.rel (%p198) target = $region24
        $region23: #{decoder_layer_forward.27} parent=11 // pred_region
          _
        $region24: #{decoder_layer_forward.27} parent=11 // pred_fallthru
          _
        // Predicated region
        $region25: #{decoder_layer_forward.27} parent=11 // pred_check
          %p201 = pneg %p125
        $region26: #{decoder_layer_forward.27} parent=11 // pred_check_branch
          %203 = sbr.rel (%p201) target = $region28
        $region27: #{decoder_layer_forward.27} parent=11 // pred_region
          _
        $region28: #{decoder_layer_forward.27} parent=11 // pred_fallthru
          _
      $region12: #{decoder_layer_forward.27} parent=5 // pred_fallthru
        _
      %p204 = scmp.lt.s32.totalorder %s15, 2
      // Predicated region
      $region29: #{decoder_layer_forward.27} parent=5 // pred_check
        %p205 = pneg %p204
      $region30: #{decoder_layer_forward.27} parent=5 // pred_check_branch
        %207 = sbr.rel (%p205) target = $region32
      $region31: #{decoder_layer_forward.27} parent=5 // pred_region
        // Predicated region
        $region33: #{decoder_layer_forward.27} parent=31 // pred_check
          %p208 = pneg %p35
        $region34: #{decoder_layer_forward.27} parent=31 // pred_check_branch
          %210 = sbr.rel (%p208) target = $region36
        $region35: #{decoder_layer_forward.27} parent=31 // pred_region
          %p211 = scmp.lt.s32.totalorder %s15, 1
          %s212 = scalar_select %p211, %s15, 1
          %s213 = smul.addr %s212, 8
          %s214 = scalar_lea.vmem %s0, %s213
        $region36: #{decoder_layer_forward.27} parent=31 // pred_fallthru
          _
        // Predicated region
        $region37: #{decoder_layer_forward.27} parent=31 // pred_check
          %p215 = pneg %p145
        $region38: #{decoder_layer_forward.27} parent=31 // pred_check_branch
          %217 = sbr.rel (%p215) target = $region40
        $region39: #{decoder_layer_forward.27} parent=31 // pred_region
          %p218 = scmp.lt.s32.totalorder %s15, 1
          %s219 = scalar_select %p218, %s15, 1
          %s220 = smul.addr %s219, 8
          %s221 = scalar_lea.vmem %s5, %s220
        $region40: #{decoder_layer_forward.27} parent=31 // pred_fallthru
          _
      $region32: #{decoder_layer_forward.27} parent=5 // pred_fallthru
        _
      %p222 = scmp.le.s32.totalorder 1, %s15
      %p223 = scmp.lt.s32.totalorder %s15, 3
      %p224 = pnand %p222, %p223
      %p225 = pneg %p224
      // Predicated region
      $region41: #{decoder_layer_forward.27} parent=5 // pred_check
        _
      $region42: #{decoder_layer_forward.27} parent=5 // pred_check_branch
        %227 = sbr.rel (%p224) target = $region44
      $region43: #{decoder_layer_forward.27} parent=5 // pred_region
        %s228 = ssub.s32 %s15, 1
        %p229 = scmp.lt.s32.totalorder %s20, 1
        %s230 = scalar_select %p229, %s20, 1
        %s231 = smul.addr %s230, 8
        %s232 = scalar_lea.vmem %s0, %s231
        %p233 = pneg %p41
        %p234 = pneg %p38
        %p235 = pneg %p62
        %p236 = pneg %p59
        %p237 = pneg %p83
        %p238 = pneg %p80
        %p239 = pneg %p104
        %p240 = pneg %p101
        %p241 = pneg %p125
        %p242 = pneg %p122
        %p243 = scmp.lt.s32.totalorder %s20, 1
        %s244 = scalar_select %p243, %s20, 1
        %s245 = smul.addr %s244, 8
        %s246 = scalar_lea.vmem %s5, %s245
        %p247 = pneg %p151
        %p248 = pneg %p148
        %p249 = pneg %p177
        %p250 = pneg %p174
        %s251 = sand.u32 %s164, 1
        %s252 = scalar_lea.sflag [#allocation3], %s251
        %s253 = sand.u32 %s164, 1
        %s254 = smul.addr %s253, 8
        %s255 = scalar_lea.vmem [#allocation2], %s254
        %p256 = scmp.lt.s32.totalorder %s20, 1
        %s257 = scalar_select %p256, %s20, 1
        %s258 = smul.addr %s257, 8
        %s259 = scalar_lea.vmem %s0, %s258
        %p260 = scmp.lt.s32.totalorder %s20, 1
        %s261 = scalar_select %p260, %s20, 1
        %s262 = smul.addr %s261, 8
        %s263 = scalar_lea.vmem %s5, %s262
        %v264 = vld [vmem:[%s259] sm:$0xff]
        %v265 = vld [vmem:[%s1] sm:$0xff]
        %v266 = vld [vmem:[%s1 + $0x8] sm:$0xff]
        %v267 = vld [vmem:[%s1 + $0x10] sm:$0xff]
        %v268 = vld [vmem:[%s1 + $0x18] sm:$0xff]
        %v269 = vld [vmem:[%s2] sm:$0x1]
        %v271 = vlaneseq
        %v272 = vshrl.u32 %v271, 7
        %v273 = vsub.s32 0, %v272
        %v274 = vrot.slane %v269, %v273
        %vm276 = vcmask 261120
        %v278 = vsel %vm276, %v264, 0
        %280 = vmatprep.subr.mxu0 0.0
        %281 = vmatpush1.msra.mxu0 %v265
        %282 = vmatprep.subr.mxu0 0.0
        %283 = vmatpush1.msra.mxu0 %v266
        %284 = vmatprep.subr.mxu0 0.0
        %285 = vmatpush1.msra.mxu0 %v267
        %286 = vmatprep.subr.mxu0 0.0
        %287 = vmatpush1.msra.mxu0 %v268
        %288 = vmatprep.subr.mxu0 0.0
        %289 = vmatpush1.msra.mxu0 0.0
        %290 = vmatprep.subr.mxu0 0.0
        %291 = vmatpush1.msra.mxu0 0.0
        %292 = vmatprep.subr.mxu0 0.0
        %293 = vmatpush1.msra.mxu0 0.0
        %294 = vmatprep.subr.mxu0 0.0
        %295 = vmatpush1.msra.mxu0 0.0
        %296 = vmatprep.subr.mxu0 0.0
        %297 = vmatpush1.msra.mxu0 0.0
        %298 = vmatprep.subr.mxu0 0.0
        %299 = vmatpush1.msra.mxu0 0.0
        %300 = vmatprep.subr.mxu0 0.0
        %301 = vmatpush1.msra.mxu0 0.0
        %302 = vmatprep.subr.mxu0 0.0
        %303 = vmatpush1.msra.mxu0 0.0
        %304 = vmatprep.subr.mxu0 0.0
        %305 = vmatpush1.msra.mxu0 0.0
        %306 = vmatprep.subr.mxu0 0.0
        %307 = vmatpush1.msra.mxu0 0.0
        %308 = vmatprep.subr.mxu0 0.0
        %309 = vmatpush1.msra.mxu0 0.0
        %310 = vmatprep.subr.mxu0 0.0
        %311 = vmatpush1.msra.mxu0 0.0
        %312 = vmatprep.subr.mxu0 0.0
        %313 = vmatpush1.msra.mxu0 0.0
        %314 = vmatprep.subr.mxu0 0.0
        %315 = vmatpush1.msra.mxu0 0.0
        %316 = vmatprep.subr.mxu0 0.0
        %317 = vmatpush1.msra.mxu0 0.0
        %318 = vmatprep.subr.mxu0 0.0
        %319 = vmatpush1.msra.mxu0 0.0
        %320 = vmatprep.subr.mxu0 0.0
        %321 = vmatpush1.msra.mxu0 0.0
        %322 = vmatprep.subr.mxu0 0.0
        %323 = vmatpush1.msra.mxu0 0.0
        %324 = vmatprep.subr.mxu0 0.0
        %325 = vmatpush1.msra.mxu0 0.0
        %326 = vmatprep.subr.mxu0 0.0
        %327 = vmatpush1.msra.mxu0 0.0
        %328 = vmatprep.subr.mxu0 0.0
        %329 = vmatpush1.msra.mxu0 0.0
        %330 = vmatprep.subr.mxu0 0.0
        %331 = vmatpush1.msra.mxu0 0.0
        %332 = vmatprep.subr.mxu0 0.0
        %333 = vmatpush1.msra.mxu0 0.0
        %334 = vmatprep.subr.mxu0 0.0
        %335 = vmatpush1.msra.mxu0 0.0
        %336 = vmatprep.subr.mxu0 0.0
        %337 = vmatpush1.msra.mxu0 0.0
        %338 = vmatprep.subr.mxu0 0.0
        %339 = vmatpush1.msra.mxu0 0.0
        %340 = vmatprep.subr.mxu0 0.0
        %341 = vmatpush1.msra.mxu0 0.0
        %342 = vmatprep.subr.mxu0 0.0
        %343 = vmatpush1.msra.mxu0 0.0
        %344 = vmatprep.mubr.f32.mxu0 0.0
        %345 = vmatmul.mubr.f32.gmra.mrb[0].mxu0 %v278
        %v346 = vpop.f32.mrb[0].mxu0
        %v347 = vadd.f32 %v274, %v346
        %v348 = vpop.f32.mrb[0].mxu0
        %349 = vdwg.mxu0
        %v350 = vmax.f32 %v347, 0.0
        %v351 = vld [vmem:[%s3] sm:$0xff]
        %v352 = vld [vmem:[%s3 + $0x8] sm:$0xff]
        %v353 = vld [vmem:[%s3 + $0x10] sm:$0xff]
        %v354 = vld [vmem:[%s3 + $0x18] sm:$0xff]
        %v355 = vld [vmem:[%s3 + $0x20] sm:$0xff]
        %v356 = vld [vmem:[%s3 + $0x28] sm:$0xff]
        %v357 = vld [vmem:[%s3 + $0x30] sm:$0xff]
        %v358 = vld [vmem:[%s3 + $0x38] sm:$0xff]
        %v359 = vld [vmem:[%s4] sm:$0x1]
        %v361 = vlaneseq
        %v362 = vshrl.u32 %v361, 7
        %v363 = vsub.s32 0, %v362
        %v364 = vrot.slane %v359, %v363
        %vm366 = vcmask 523264
        %v368 = vsel %vm366, %v350, 0
        %370 = vmatprep.subr.mxu0 0.0
        %371 = vmatpush1.msra.mxu0 %v351
        %372 = vmatprep.subr.mxu0 0.0
        %373 = vmatpush1.msra.mxu0 %v352
        %374 = vmatprep.subr.mxu0 0.0
        %375 = vmatpush1.msra.mxu0 %v353
        %376 = vmatprep.subr.mxu0 0.0
        %377 = vmatpush1.msra.mxu0 %v354
        %378 = vmatprep.subr.mxu0 0.0
        %379 = vmatpush1.msra.mxu0 %v355
        %380 = vmatprep.subr.mxu0 0.0
        %381 = vmatpush1.msra.mxu0 %v356
        %382 = vmatprep.subr.mxu0 0.0
        %383 = vmatpush1.msra.mxu0 %v357
        %384 = vmatprep.subr.mxu0 0.0
        %385 = vmatpush1.msra.mxu0 %v358
        %386 = vmatprep.subr.mxu0 0.0
        %387 = vmatpush1.msra.mxu0 0.0
        %388 = vmatprep.subr.mxu0 0.0
        %389 = vmatpush1.msra.mxu0 0.0
        %390 = vmatprep.subr.mxu0 0.0
        %391 = vmatpush1.msra.mxu0 0.0
        %392 = vmatprep.subr.mxu0 0.0
        %393 = vmatpush1.msra.mxu0 0.0
        %394 = vmatprep.subr.mxu0 0.0
        %395 = vmatpush1.msra.mxu0 0.0
        %396 = vmatprep.subr.mxu0 0.0
        %397 = vmatpush1.msra.mxu0 0.0
        %398 = vmatprep.subr.mxu0 0.0
        %399 = vmatpush1.msra.mxu0 0.0
        %400 = vmatprep.subr.mxu0 0.0
        %401 = vmatpush1.msra.mxu0 0.0
        %402 = vmatprep.subr.mxu0 0.0
        %403 = vmatpush1.msra.mxu0 0.0
        %404 = vmatprep.subr.mxu0 0.0
        %405 = vmatpush1.msra.mxu0 0.0
        %406 = vmatprep.subr.mxu0 0.0
        %407 = vmatpush1.msra.mxu0 0.0
        %408 = vmatprep.subr.mxu0 0.0
        %409 = vmatpush1.msra.mxu0 0.0
        %410 = vmatprep.subr.mxu0 0.0
        %411 = vmatpush1.msra.mxu0 0.0
        %412 = vmatprep.subr.mxu0 0.0
        %413 = vmatpush1.msra.mxu0 0.0
        %414 = vmatprep.subr.mxu0 0.0
        %415 = vmatpush1.msra.mxu0 0.0
        %416 = vmatprep.subr.mxu0 0.0
        %417 = vmatpush1.msra.mxu0 0.0
        %418 = vmatprep.subr.mxu0 0.0
        %419 = vmatpush1.msra.mxu0 0.0
        %420 = vmatprep.subr.mxu0 0.0
        %421 = vmatpush1.msra.mxu0 0.0
        %422 = vmatprep.subr.mxu0 0.0
        %423 = vmatpush1.msra.mxu0 0.0
        %424 = vmatprep.subr.mxu0 0.0
        %425 = vmatpush1.msra.mxu0 0.0
        %426 = vmatprep.subr.mxu0 0.0
        %427 = vmatpush1.msra.mxu0 0.0
        %428 = vmatprep.subr.mxu0 0.0
        %429 = vmatpush1.msra.mxu0 0.0
        %430 = vmatprep.subr.mxu0 0.0
        %431 = vmatpush1.msra.mxu0 0.0
        %432 = vmatprep.subr.mxu0 0.0
        %433 = vmatpush1.msra.mxu0 0.0
        %434 = vmatprep.mubr.f32.mxu0 0.0
        %435 = vmatmul.mubr.f32.gmra.mrb[0].mxu0 %v368
        %v436 = vpop.f32.mrb[0].mxu0
        %v437 = vadd.f32 %v364, %v436
        %v438 = vpop.f32.mrb[0].mxu0
        %439 = vdwg.mxu0
        %v440 = vld [vmem:[%s263] sm:$0xff]
        %v441 = vadd.f32 %v437, %v440
        %442 = vst.msk [vmem:[%s255] sm:$0xff] %vm276, %v441
        %s443 = sand.u32 %s164, 1
        %s444 = scalar_lea.sflag [#allocation3], %s443
        %s445 = sand.u32 %s164, 1
        %s446 = smul.addr %s445, 8
        %s447 = scalar_lea.vmem [#allocation2], %s446
        // Predicated region
        $region45: #{decoder_layer_forward.27} parent=43 // pred_check
          %p448 = pneg %p174
        $region46: #{decoder_layer_forward.27} parent=43 // pred_check_branch
          %450 = sbr.rel (%p448) target = $region48
        $region47: #{decoder_layer_forward.27} parent=43 // pred_region
          %s452 = ssub.s32 128, 128
          %453 = vsyncadd %s444, %s452
          %s454 = smul.addr %s20, 128
          %s455 = scalar_lea.hbm %s6, %s454
          %s457 = sshll.u32 %s447, 4
          %s458 = int_to_ptr.vmem [resolvable:$true] %s457
          %460 = dma.vmem_to_hbm [thread:$0]  %s458, 128, %s455, %s444
        $region48: #{decoder_layer_forward.27} parent=43 // pred_fallthru
          _
      $region44: #{decoder_layer_forward.27} parent=5 // pred_fallthru
        _
      %p461 = scmp.le.s32.totalorder 2, %s15
      // Predicated region
      $region49: #{decoder_layer_forward.27} parent=5 // pred_check
        %p462 = pneg %p461
      $region50: #{decoder_layer_forward.27} parent=5 // pred_check_branch
        %464 = sbr.rel (%p462) target = $region52
      $region51: #{decoder_layer_forward.27} parent=5 // pred_region
        %s465 = ssub.s32 %s15, 2
        // Predicated region
        $region53: #{decoder_layer_forward.27} parent=51 // pred_check
          %p466 = pneg %p180
        $region54: #{decoder_layer_forward.27} parent=51 // pred_check_branch
          %468 = sbr.rel (%p466) target = $region56
        $region55: #{decoder_layer_forward.27} parent=51 // pred_region
          %s469 = sand.u32 %s165, 1
          %s470 = scalar_lea.sflag [#allocation3], %s469
          %s471 = sand.u32 %s165, 1
          %s472 = smul.addr %s471, 8
          %s473 = scalar_lea.vmem [#allocation2], %s472
          %474 = dma.done %s470, 128
        $region56: #{decoder_layer_forward.27} parent=51 // pred_fallthru
          _
      $region52: #{decoder_layer_forward.27} parent=5 // pred_fallthru
        _
    $region6: #{decoder_layer_forward.27} parent=1 // loop_footer
      %s19 = sadd.s32 1, %s15
    $region7: #{decoder_layer_forward.27} parent=1 // loop_footer_branch
      %14 = sbr.rel target = $region3
    $region8: #{decoder_layer_forward.27} parent=1 // loop_exit
      _
    %475 = vsyncpa [#allocation3], 1
    %s476 = scalar_lea.sflag [#allocation3], 1
    %477 = vsyncpa %s476, 1

</llo_original>
